<compile_context>
chip_gen: v5e
topology: v5e:2x2
jax: 0.10.0
libtpu: 0.0.40
codegen_flags: <defaults>
</compile_context>

<pallas_src>
import inspect
import math
from functools import partial

import jax
import jax.numpy as jnp
from jax.experimental import pallas as pl
from jax.experimental.pallas import tpu as pltpu

EPS = float(jnp.finfo(jnp.float32).eps)        # nn.RMSNorm default eps for float32
HIGHEST = jax.lax.Precision.HIGHEST
NEG_INF = -1e30                                # NaN-safe mask constant (f32 / bf16 safe)

_FORI_UNROLL = ({"unroll": True}
                if "unroll" in inspect.signature(jax.lax.fori_loop).parameters else {})


# ------------------------------ fused kernel ------------------------------

def _block_kernel(x_q_ref, x_p_ref, n1_ref, n2_ref,
                  kvw_ref, wq_ref, wkr_ref, wepi_ref,
                  cos_q_ref, sin_q_ref, cos_p_ref, sin_p_ref, padk_ref,
                  wg_ref, wu_ref, wd_ref,
                  o_ref, *, num_heads, window, tq, eps):
    """One (batch, q-tile) step of the entire transformer block."""
    qi = pl.program_id(1)

    x = x_q_ref[0]                                   # [TQ, D] residual / query rows (f32)
    xp = x_p_ref[0]                                  # [TQ, D] previous (halo) rows

    def rmsnorm(v, w):
        return v * jax.lax.rsqrt(jnp.mean(v * v, axis=-1, keepdims=True) + eps) * w

    h1 = rmsnorm(x, n1_ref[...])                     # f32
    h1p = rmsnorm(xp, n1_ref[...])
    h1_bf = h1.astype(jnp.bfloat16)
    h1p_bf = h1p.astype(jnp.bfloat16)

    # ---- kv projection + RoPE, recomputed per tile (halo tile recomputed) ----
    # TODO(synk): switch rotate-half to pltpu.roll(kv, d_c//2, 1) * sign once d_c
    #             is a multiple of 128 (XLU-slot rotation instead of slice+concat).
    def rope(kv, cos, sin):
        d = kv.shape[-1]
        rot = jnp.concatenate([-kv[:, d // 2:], kv[:, : d // 2]], axis=-1)
        return kv * cos + rot * sin

    kv_cur = rope(jnp.dot(h1_bf, kvw_ref[...], preferred_element_type=jnp.float32),
                  cos_q_ref[...], sin_q_ref[...])                     # [TQ, d_c]
    kv_prev = rope(jnp.dot(h1p_bf, kvw_ref[...], preferred_element_type=jnp.float32),
                   cos_p_ref[...], sin_p_ref[...])                    # [TQ, d_c]
    kv = jnp.concatenate([kv_prev, kv_cur], axis=0)  # [2*TQ, d_c]: keys == values (MLA)
    kv_bf = kv.astype(jnp.bfloat16)

    # ---- banded sliding-window mask, built only for this (TQ, 2*TQ) tile ----
    L = 2 * tq
    q_idx = jax.lax.broadcasted_iota(jnp.int32, (tq, L), 0) + qi * tq
    k_idx = jax.lax.broadcasted_iota(jnp.int32, (tq, L), 1) + (qi - 1) * tq
    keep = (k_idx >= 0) & (k_idx <= q_idx) & ((q_idx - k_idx) <= window)
    keep = keep & (padk_ref[0, 0] < 0.5)             # key-padding, [1, L] broadcast
    # NOTE: zeroing padded kv rows (reference masked_fill) is redundant here because
    # padded keys are masked out of every softmax row before they can act as values.

    # ---- MLA attention: KV + mask shared across heads, head-major weight refs ----
    d_model = x.shape[-1]

    def head_body(h, acc):
        qh = jnp.dot(h1_bf, wq_ref[h], preferred_element_type=jnp.float32)    # [TQ, r]
        kh = jnp.dot(kv_bf, wkr_ref[h], preferred_element_type=jnp.float32)   # [L, r]
        s = jax.lax.dot_general(qh.astype(jnp.bfloat16), kh.astype(jnp.bfloat16),
                                (((1,), (1,)), ((), ())),
                                preferred_element_type=jnp.float32)            # [TQ, L]
        s = jnp.where(keep, s, NEG_INF)
        m = jnp.max(s, axis=-1, keepdims=True)
        p = jnp.exp(s - m)                                                     # f32 EUP
        attn = p / jnp.sum(p, axis=-1, keepdims=True)                          # exact
        ctx = jnp.dot(attn.astype(jnp.bfloat16), kv_bf,
                      preferred_element_type=jnp.float32)                      # [TQ, d_c]
        # folded (w_kc_kv^T ∘ out_proj ∘ o_proj) per-head epilogue, one matmul
        return acc + jnp.dot(ctx.astype(jnp.bfloat16), wepi_ref[h],
                             preferred_element_type=jnp.float32)               # [TQ, D]

    acc = jax.lax.fori_loop(0, num_heads, head_body,
                            jnp.zeros((tq, d_model), jnp.float32), **_FORI_UNROLL)

    y = x + acc                                       # attention residual (f32)

    # ---- fused FFN: RMSNorm -> SwiGLU -> residual (no y HBM round trip) ----
    h2_bf = rmsnorm(y, n2_ref[...]).astype(jnp.bfloat16)
    g = jnp.dot(h2_bf, wg_ref[...], preferred_element_type=jnp.float32)
    u = jnp.dot(h2_bf, wu_ref[...], preferred_element_type=jnp.float32)
    act = (g * jax.nn.sigmoid(g)) * u                 # SiLU(gate) * up, f32 VPU/EUP
    ffn = jnp.dot(act.astype(jnp.bfloat16), wd_ref[...],
                  preferred_element_type=jnp.float32)
    o_ref[0, :, :] = y + ffn                          # lane-dense [TQ, D] store


# ----------------------------- weight folding -----------------------------

def rope_tables(L, d_c):
    inv_freq = 1.0 / (10000.0 ** (jnp.arange(0, d_c, 2, dtype=jnp.float32) / d_c))
    t = jnp.arange(L, dtype=jnp.float32)
    freqs = t[:, None] * inv_freq[None, :]                    # [L, d_c//2]
    sin = jnp.repeat(jnp.sin(freqs), 2, axis=-1)              # [L, d_c]
    cos = jnp.repeat(jnp.cos(freqs), 2, axis=-1)
    return sin, cos


def prepare_block_params(params):
    """Fold / stack / cast weights ONCE, outside the per-token hot path."""
    H, K, _d_cq = params["w_kc_q"].shape
    d_c = params["w_kc_kv"].shape[2]
    r = params["W_qr"].shape[2]
    D = params["q_proj_w"].shape[1]
    scale = 1.0 / math.sqrt(r)        # flex_attention default score scale 1/sqrt(retr_dim)

    # query path: q_proj ∘ w_kc_q ∘ W_qr ∘ scale  ->  head-major [H, D, r]
    q_w = params["q_proj_w"].reshape(H, K, D)
    tmp = jnp.einsum("hkq,hqr->hkr", params["w_kc_q"], params["W_qr"],
                     precision=HIGHEST) * scale                              # [H, K, r]
    wq = jnp.einsum("hkd,hkr->hdr", q_w, tmp, precision=HIGHEST)             # [H, D, r]

    # value/output path: w_kc_kv^T ∘ out_proj ∘ o_proj  ->  head-major [H, d_c, D]
    wo_comb = jnp.dot(params["o_proj_w"], params["out_proj_w"],
                      precision=HIGHEST)                                     # [D, H*K]
    wo_heads = wo_comb.T.reshape(H, K, D)
    wepi = jnp.einsum("hkd,hke->hde", params["w_kc_kv"], wo_heads,
                      precision=HIGHEST)                                     # [H, d_c, D]

    bf = jnp.bfloat16
    return dict(
        norm1_w=params["norm1_w"][None, :], norm2_w=params["norm2_w"][None, :],
        kvw_t=params["kv_proj_w"].T.astype(bf),        # [D, d_c]
        wq=wq.astype(bf),                              # [H, D, r]
        wkr=params["W_kr"].astype(bf),                 # [H, d_c, r]
        wepi=wepi.astype(bf),                          # [H, d_c, D]
        wg_t=params["ffn_wg"].T.astype(bf),            # [D, Hf]
        wu_t=params["ffn_wu"].T.astype(bf),            # [D, Hf]
        wd_t=params["ffn_wd"].T.astype(bf),            # [Hf, D]
    )


def _key_pad_windows(key_padding_mask, B, S, tq):
    """[B, nQ, 1, 2*TQ] float mask (1.0 == masked key) for each q-tile's kv halo."""
    nQ = S // tq
    if key_padding_mask is None:
        return jnp.zeros((B, nQ, 1, 2 * tq), jnp.float32)
    padf = key_padding_mask.astype(jnp.float32)
    padf_ext = jnp.concatenate([jnp.ones((B, tq), jnp.float32), padf], axis=1)
    idx = jnp.arange(nQ)[:, None] * tq + jnp.arange(2 * tq)[None, :]
    return padf_ext[:, idx].reshape(B, nQ, 1, 2 * tq)


# ----------------------------- block wrapper -----------------------------

def transformer_block(x, prep, window, key_padding_mask=None, tq=8):
    B, S, D = x.shape
    d_c = prep["kvw_t"].shape[1]
    H, _, r = prep["wq"].shape
    Hf = prep["wg_t"].shape[1]

    assert S % tq == 0, "TODO(synk): pad S to a multiple of the q-tile"
    assert window <= tq, "TODO(synk): window > TQ needs a deeper kv halo"
    nQ = S // tq
    L = 2 * tq

    sin, cos = rope_tables(S, d_c)
    padw = _key_pad_windows(key_padding_mask, B, S, tq)

    cur = lambda b, i: (b, i, 0)
    prev = lambda b, i: (b, jnp.maximum(i - 1, 0), 0)
    full2 = lambda b, i: (0, 0)
    full3 = lambda b, i: (0, 0, 0)
    rope_cur = lambda b, i: (i, 0)
    rope_prev = lambda b, i: (jnp.maximum(i - 1, 0), 0)

    # advisory scheduling hints
    flops = B * nQ * (
        4 * tq * D * d_c
        + H * 2 * (tq * D * r + L * d_c * r + tq * L * r + tq * L * d_c + tq * d_c * D)
        + 6 * tq * D * Hf)
    transcendentals = B * nQ * (H * tq * L + tq * Hf)
    bytes_accessed = 4 * 3 * B * S * D + 2 * (
        D * d_c + H * (D * r + d_c * r + d_c * D) + 3 * D * Hf)

    return pl.pallas_call(
        partial(_block_kernel, num_heads=H, window=window, tq=tq, eps=EPS),
        grid=(B, nQ),
        in_specs=[
            pl.BlockSpec((1, tq, D), cur),             # x  (q-tile / residual)
            pl.BlockSpec((1, tq, D), prev),            # x  (halo tile)
            pl.BlockSpec((1, D), full2),               # norm1 weight (f32)
            pl.BlockSpec((1, D), full2),               # norm2 weight (f32)
            pl.BlockSpec((D, d_c), full2),             # kv_proj^T        (bf16)
            pl.BlockSpec((H, D, r), full3),            # folded query path (bf16)
            pl.BlockSpec((H, d_c, r), full3),          # retrieval-key proj (bf16)
            pl.BlockSpec((H, d_c, D), full3),          # folded out epilogue (bf16)
            pl.BlockSpec((tq, d_c), rope_cur),         # cos (q tile)
            pl.BlockSpec((tq, d_c), rope_cur),         # sin (q tile)
            pl.BlockSpec((tq, d_c), rope_prev),        # cos (halo tile)
            pl.BlockSpec((tq, d_c), rope_prev),        # sin (halo tile)
            pl.BlockSpec((1, 1, 1, L), lambda b, i: (b, i, 0, 0)),   # key-pad window
            pl.BlockSpec((D, Hf), full2),              # ffn gate^T (bf16)
            pl.BlockSpec((D, Hf), full2),              # ffn up^T   (bf16)
            pl.BlockSpec((Hf, D), full2),              # ffn down^T (bf16)
        ],
        out_specs=pl.BlockSpec((1, tq, D), cur),
        out_shape=jax.ShapeDtypeStruct((B, S, D), x.dtype),
        compiler_params=pltpu.CompilerParams(
            dimension_semantics=("parallel", "parallel"),
            # safe on all gens (v7x: 64 MiB physical); raise toward ~100 MiB and
            # enlarge TQ on v5e/v6e, shrink TQ on v7x at production shapes.
            vmem_limit_bytes=48 * 1024 * 1024),
        cost_estimate=pl.CostEstimate(flops=int(flops),
                                      transcendentals=int(transcendentals),
                                      bytes_accessed=int(bytes_accessed)),
    )(x, x, prep["norm1_w"], prep["norm2_w"],
      prep["kvw_t"], prep["wq"], prep["wkr"], prep["wepi"],
      cos, sin, cos, sin, padw,
      prep["wg_t"], prep["wu_t"], prep["wd_t"])


# --------------------------- pure-JAX reference ---------------------------

def reference_block(x, params, window, key_padding_mask=None):
    B, S, D = x.shape
    H, K, d_cq = params["w_kc_q"].shape
    d_c = params["w_kc_kv"].shape[2]
    r = params["W_qr"].shape[2]

    def rms(v, w):
        return v * jax.lax.rsqrt(jnp.mean(v * v, -1, keepdims=True) + EPS) * w

    h1 = rms(x, params["norm1_w"])
    kv_c = jnp.einsum("bsd,cd->bsc", h1, params["kv_proj_w"])
    if key_padding_mask is not None:
        kv_c = jnp.where(key_padding_mask[..., None], 0.0, kv_c)
    sin, cos = rope_tables(S, d_c)
    x1, x2 = kv_c[..., : d_c // 2], kv_c[..., d_c // 2:]
    kv_roped = kv_c * cos[None] + jnp.concatenate([-x2, x1], -1) * sin[None]

    q_hk = jnp.einsum("bsd,nd->bsn", h1, params["q_proj_w"]).reshape(B, S, H, K)
    q_big = jnp.einsum("bshk,hkq->bshq", q_hk, params["w_kc_q"])
    q_r = jnp.einsum("bshq,hqr->bhsr", q_big, params["W_qr"])
    k_r = jnp.einsum("bld,hdr->bhlr", kv_roped, params["W_kr"])
    s = jnp.einsum("bhsr,bhlr->bhsl", q_r, k_r) / math.sqrt(r)

    qi = jnp.arange(S)[:, None]
    ki = jnp.arange(S)[None, :]
    keep = (ki <= qi) & ((qi - ki) <= window)
    keep = keep[None, None]
    if key_padding_mask is not None:
        keep = keep & (~key_padding_mask)[:, None, None, :]
    s = jnp.where(keep, s, -jnp.inf)
    attn = jax.nn.softmax(s, axis=-1)
    ctx_c = jnp.einsum("bhsl,bld->bhsd", attn, kv_roped)
    ctx_lat = jnp.einsum("bhsd,hkd->bhsk", ctx_c, params["w_kc_kv"])
    ctx_lat = jnp.transpose(ctx_lat, (0, 2, 1, 3)).reshape(B, S, H * K)
    ctx = jnp.einsum("bsn,dn->bsd", ctx_lat, params["out_proj_w"])
    attn_out = jnp.einsum("bsd,ed->bse", ctx, params["o_proj_w"])
    x = x + attn_out

    h2 = rms(x, params["norm2_w"])
    g = jnp.einsum("bsd,hd->bsh", h2, params["ffn_wg"])
    u = jnp.einsum("bsd,hd->bsh", h2, params["ffn_wu"])
    ffn = jnp.einsum("bsh,dh->bsd", (g * jax.nn.sigmoid(g)) * u, params["ffn_wd"])
    return x + ffn


# ------------------------------ params init ------------------------------

def init_params(key, dim, H, K, d_c, d_cq, r, ffn_hidden):
    ks = jax.random.split(key, 11)

    def unif(k, shape, fan_in):
        bound = 1.0 / math.sqrt(fan_in)
        return jax.random.uniform(k, shape, jnp.float32, -bound, bound)

    return dict(
        norm1_w=jnp.ones((dim,), jnp.float32),
        norm2_w=jnp.ones((dim,), jnp.float32),
        q_proj_w=unif(ks[0], (H * K, dim), dim),
        kv_proj_w=unif(ks[1], (d_c, dim), dim),
        out_proj_w=unif(ks[2], (dim, H * K), H * K),
        o_proj_w=unif(ks[3], (dim, dim), dim),
        w_kc_q=unif(ks[4], (H, K, d_cq), K * d_cq),
        w_kc_kv=unif(ks[5], (H, K, d_c), K * d_c),
        W_qr=unif(ks[6], (H, d_cq, r), d_cq * r) / math.sqrt(r),  # baked-in 1/sqrt(r)
        W_kr=unif(ks[7], (H, d_c, r), d_c * r),
        ffn_wg=unif(ks[8], (ffn_hidden, dim), dim),
        ffn_wu=unif(ks[9], (ffn_hidden, dim), dim),
        ffn_wd=unif(ks[10], (dim, ffn_hidden), ffn_hidden),
    )


# ---------------------------------- main ----------------------------------

if __name__ == "__main__":
    B, S, D = 2, 16, 32                  # batch, seq, model dim
    H, K = 4, 16                         # num_heads, head_dim
    d_c, d_cq, r = 32, 48, 16            # kv_comp_dim, q_comp_dim, retr_dim
    window = 4
    ffn_hidden = D * 4
    TQ = 8                               # q-tile (banded attention), window <= TQ

    key = jax.random.PRNGKey(0)
    kx, kp = jax.random.split(key)
    x = jax.random.normal(kx, (B, S, D), jnp.float32)
    params = init_params(kp, D, H, K, d_c, d_cq, r, ffn_hidden)

    prep = prepare_block_params(params)               # one-time weight folding (bf16)
    block = jax.jit(partial(transformer_block, window=window, tq=TQ))
    out = jax.block_until_ready(block(x, prep))

    ref = reference_block(x, params, window, key_padding_mask=None)
    assert out.shape == (B, S, D)
    err = float(jnp.max(jnp.abs(out - ref)))
    assert jnp.allclose(out, ref, atol=3e-2, rtol=3e-2), f"max abs err {err}"
    print("KERNEL_OK")
</pallas_src>

<mosaic_0001>
module attributes {stable_mosaic.version = 11 : i64} {
  func.func @_block_kernel(%arg0: i32, %arg1: i32, %arg2: memref<1x8x32xf32, #tpu.memory_space<vmem>>, %arg3: memref<1x8x32xf32, #tpu.memory_space<vmem>>, %arg4: memref<1x32xf32, #tpu.memory_space<vmem>>, %arg5: memref<1x32xf32, #tpu.memory_space<vmem>>, %arg6: memref<32x32xbf16, #tpu.memory_space<vmem>>, %arg7: memref<4x32x16xbf16, #tpu.memory_space<vmem>>, %arg8: memref<4x32x16xbf16, #tpu.memory_space<vmem>>, %arg9: memref<4x32x32xbf16, #tpu.memory_space<vmem>>, %arg10: memref<8x32xf32, #tpu.memory_space<vmem>>, %arg11: memref<8x32xf32, #tpu.memory_space<vmem>>, %arg12: memref<8x32xf32, #tpu.memory_space<vmem>>, %arg13: memref<8x32xf32, #tpu.memory_space<vmem>>, %arg14: memref<1x1x1x16xf32, #tpu.memory_space<vmem>>, %arg15: memref<32x128xbf16, #tpu.memory_space<vmem>>, %arg16: memref<32x128xbf16, #tpu.memory_space<vmem>>, %arg17: memref<128x32xbf16, #tpu.memory_space<vmem>>, %arg18: memref<1x8x32xf32, #tpu.memory_space<vmem>>) attributes {dimension_semantics = [#tpu.dimension_semantics<parallel>, #tpu.dimension_semantics<parallel>], iteration_bounds = array<i64: 2, 2>, scalar_prefetch = 0 : i64, scratch_operands = 0 : i64, tpu.core_type = #tpu.core_type<tc>, window_params = [{transform_indices = @transform_0, window_bounds = array<i64: 1, 8, 32>}, {transform_indices = @transform_1, window_bounds = array<i64: 1, 8, 32>}, {pipeline_mode = #tpu.pipeline_mode<synchronous>, transform_indices = @transform_2, window_bounds = array<i64: 1, 32>}, {pipeline_mode = #tpu.pipeline_mode<synchronous>, transform_indices = @transform_3, window_bounds = array<i64: 1, 32>}, {pipeline_mode = #tpu.pipeline_mode<synchronous>, transform_indices = @transform_4, window_bounds = array<i64: 32, 32>}, {pipeline_mode = #tpu.pipeline_mode<synchronous>, transform_indices = @transform_5, window_bounds = array<i64: 4, 32, 16>}, {pipeline_mode = #tpu.pipeline_mode<synchronous>, transform_indices = @transform_6, window_bounds = array<i64: 4, 32, 16>}, {pipeline_mode = #tpu.pipeline_mode<synchronous>, transform_indices = @transform_7, window_bounds = array<i64: 4, 32, 32>}, {transform_indices = @transform_8, window_bounds = array<i64: 8, 32>}, {transform_indices = @transform_9, window_bounds = array<i64: 8, 32>}, {transform_indices = @transform_10, window_bounds = array<i64: 8, 32>}, {transform_indices = @transform_11, window_bounds = array<i64: 8, 32>}, {transform_indices = @transform_12, window_bounds = array<i64: 1, 1, 1, 16>}, {pipeline_mode = #tpu.pipeline_mode<synchronous>, transform_indices = @transform_13, window_bounds = array<i64: 32, 128>}, {pipeline_mode = #tpu.pipeline_mode<synchronous>, transform_indices = @transform_14, window_bounds = array<i64: 32, 128>}, {pipeline_mode = #tpu.pipeline_mode<synchronous>, transform_indices = @transform_15, window_bounds = array<i64: 128, 32>}, {transform_indices = @transform_16, window_bounds = array<i64: 1, 8, 32>}]} {
    %c0 = arith.constant 0 : index
    %c0_0 = arith.constant 0 : index
    %c0_1 = arith.constant 0 : index
    %0 = vector.load %arg2[%c0, %c0_0, %c0_1] : memref<1x8x32xf32, #tpu.memory_space<vmem>>, vector<1x8x32xf32>
    %1 = vector.shape_cast %0 : vector<1x8x32xf32> to vector<8x32xf32>
    %c0_2 = arith.constant 0 : index
    %c0_3 = arith.constant 0 : index
    %c0_4 = arith.constant 0 : index
    %2 = vector.load %arg3[%c0_2, %c0_3, %c0_4] : memref<1x8x32xf32, #tpu.memory_space<vmem>>, vector<1x8x32xf32>
    %3 = vector.shape_cast %2 : vector<1x8x32xf32> to vector<8x32xf32>
    %c0_5 = arith.constant 0 : index
    %c0_6 = arith.constant 0 : index
    %4 = vector.load %arg4[%c0_5, %c0_6] : memref<1x32xf32, #tpu.memory_space<vmem>>, vector<1x32xf32>
    %5 = arith.mulf %1, %1 : vector<8x32xf32>
    %cst = arith.constant dense<0.000000e+00> : vector<8xf32>
    %6 = vector.multi_reduction <add>, %5, %cst [1] : vector<8x32xf32> to vector<8xf32>
    %7 = vector.shape_cast %6 : vector<8xf32> to vector<8x1xf32>
    %cst_7 = arith.constant 3.200000e+01 : f32
    %8 = vector.broadcast %cst_7 : f32 to vector<8x1xf32>
    %9 = arith.divf %7, %8 : vector<8x1xf32>
    %cst_8 = arith.constant 1.1920929E-7 : f32
    %10 = vector.broadcast %cst_8 : f32 to vector<8x1xf32>
    %11 = arith.addf %9, %10 : vector<8x1xf32>
    %12 = math.rsqrt %11 : vector<8x1xf32>
    %13 = vector.broadcast %12 : vector<8x1xf32> to vector<8x32xf32>
    %14 = arith.mulf %1, %13 : vector<8x32xf32>
    %15 = vector.broadcast %4 : vector<1x32xf32> to vector<8x32xf32>
    %16 = arith.mulf %14, %15 : vector<8x32xf32>
    %c0_9 = arith.constant 0 : index
    %c0_10 = arith.constant 0 : index
    %17 = vector.load %arg4[%c0_9, %c0_10] : memref<1x32xf32, #tpu.memory_space<vmem>>, vector<1x32xf32>
    %18 = arith.mulf %3, %3 : vector<8x32xf32>
    %cst_11 = arith.constant dense<0.000000e+00> : vector<8xf32>
    %19 = vector.multi_reduction <add>, %18, %cst_11 [1] : vector<8x32xf32> to vector<8xf32>
    %20 = vector.shape_cast %19 : vector<8xf32> to vector<8x1xf32>
    %cst_12 = arith.constant 3.200000e+01 : f32
    %21 = vector.broadcast %cst_12 : f32 to vector<8x1xf32>
    %22 = arith.divf %20, %21 : vector<8x1xf32>
    %cst_13 = arith.constant 1.1920929E-7 : f32
    %23 = vector.broadcast %cst_13 : f32 to vector<8x1xf32>
    %24 = arith.addf %22, %23 : vector<8x1xf32>
    %25 = math.rsqrt %24 : vector<8x1xf32>
    %26 = vector.broadcast %25 : vector<8x1xf32> to vector<8x32xf32>
    %27 = arith.mulf %3, %26 : vector<8x32xf32>
    %28 = vector.broadcast %17 : vector<1x32xf32> to vector<8x32xf32>
    %29 = arith.mulf %27, %28 : vector<8x32xf32>
    %30 = arith.truncf %16 : vector<8x32xf32> to vector<8x32xbf16>
    %31 = arith.truncf %29 : vector<8x32xf32> to vector<8x32xbf16>
    %c0_14 = arith.constant 0 : index
    %c0_15 = arith.constant 0 : index
    %32 = vector.load %arg6[%c0_14, %c0_15] : memref<32x32xbf16, #tpu.memory_space<vmem>>, vector<32x32xbf16>
    %cst_16 = arith.constant dense<0.000000e+00> : vector<8x32xf32>
    %33 = tpu.matmul %30, %32, %cst_16 {dimension_numbers = #tpu.dot_dimension_numbers<[1], [0], [0], [1], [0, 0, 1, 1], [], []>} : vector<8x32xbf16>, vector<32x32xbf16>, vector<8x32xf32> -> vector<8x32xf32>
    %c0_17 = arith.constant 0 : index
    %c0_18 = arith.constant 0 : index
    %34 = vector.load %arg10[%c0_17, %c0_18] : memref<8x32xf32, #tpu.memory_space<vmem>>, vector<8x32xf32>
    %c0_19 = arith.constant 0 : index
    %c0_20 = arith.constant 0 : index
    %35 = vector.load %arg11[%c0_19, %c0_20] : memref<8x32xf32, #tpu.memory_space<vmem>>, vector<8x32xf32>
    %36 = vector.extract_strided_slice %33 {offsets = [0, 16], sizes = [8, 16], strides = [1, 1]} : vector<8x32xf32> to vector<8x16xf32>
    %cst_21 = arith.constant 0.000000e+00 : f32
    %37 = vector.broadcast %cst_21 : f32 to vector<8x16xf32>
    %38 = arith.subf %37, %36 : vector<8x16xf32>
    %39 = vector.extract_strided_slice %33 {offsets = [0, 0], sizes = [8, 16], strides = [1, 1]} : vector<8x32xf32> to vector<8x16xf32>
    %40 = tpu.concatenate %38, %39 in 1 : vector<8x16xf32>, vector<8x16xf32> -> vector<8x32xf32>
    %41 = arith.mulf %33, %34 : vector<8x32xf32>
    %42 = arith.mulf %40, %35 : vector<8x32xf32>
    %43 = arith.addf %41, %42 : vector<8x32xf32>
    %c0_22 = arith.constant 0 : index
    %c0_23 = arith.constant 0 : index
    %44 = vector.load %arg6[%c0_22, %c0_23] : memref<32x32xbf16, #tpu.memory_space<vmem>>, vector<32x32xbf16>
    %cst_24 = arith.constant dense<0.000000e+00> : vector<8x32xf32>
    %45 = tpu.matmul %31, %44, %cst_24 {dimension_numbers = #tpu.dot_dimension_numbers<[1], [0], [0], [1], [0, 0, 1, 1], [], []>} : vector<8x32xbf16>, vector<32x32xbf16>, vector<8x32xf32> -> vector<8x32xf32>
    %c0_25 = arith.constant 0 : index
    %c0_26 = arith.constant 0 : index
    %46 = vector.load %arg12[%c0_25, %c0_26] : memref<8x32xf32, #tpu.memory_space<vmem>>, vector<8x32xf32>
    %c0_27 = arith.constant 0 : index
    %c0_28 = arith.constant 0 : index
    %47 = vector.load %arg13[%c0_27, %c0_28] : memref<8x32xf32, #tpu.memory_space<vmem>>, vector<8x32xf32>
    %48 = vector.extract_strided_slice %45 {offsets = [0, 16], sizes = [8, 16], strides = [1, 1]} : vector<8x32xf32> to vector<8x16xf32>
    %cst_29 = arith.constant 0.000000e+00 : f32
    %49 = vector.broadcast %cst_29 : f32 to vector<8x16xf32>
    %50 = arith.subf %49, %48 : vector<8x16xf32>
    %51 = vector.extract_strided_slice %45 {offsets = [0, 0], sizes = [8, 16], strides = [1, 1]} : vector<8x32xf32> to vector<8x16xf32>
    %52 = tpu.concatenate %50, %51 in 1 : vector<8x16xf32>, vector<8x16xf32> -> vector<8x32xf32>
    %53 = arith.mulf %45, %46 : vector<8x32xf32>
    %54 = arith.mulf %52, %47 : vector<8x32xf32>
    %55 = arith.addf %53, %54 : vector<8x32xf32>
    %56 = tpu.concatenate %55, %43 in 0 : vector<8x32xf32>, vector<8x32xf32> -> vector<16x32xf32>
    %57 = arith.truncf %56 : vector<16x32xf32> to vector<16x32xbf16>
    %58 = tpu.iota {dimensions = array<i32: 0>} : vector<8x16xi32>
    %c8_i32 = arith.constant 8 : i32
    %59 = arith.muli %arg1, %c8_i32 : i32
    %60 = vector.broadcast %59 : i32 to vector<8x16xi32>
    %61 = arith.addi %58, %60 : vector<8x16xi32>
    %62 = tpu.iota {dimensions = array<i32: 1>} : vector<8x16xi32>
    %c1_i32 = arith.constant 1 : i32
    %63 = arith.subi %arg1, %c1_i32 : i32
    %c8_i32_30 = arith.constant 8 : i32
    %64 = arith.muli %63, %c8_i32_30 : i32
    %65 = vector.broadcast %64 : i32 to vector<8x16xi32>
    %66 = arith.addi %62, %65 : vector<8x16xi32>
    %c0_i32 = arith.constant 0 : i32
    %67 = vector.broadcast %c0_i32 : i32 to vector<8x16xi32>
    %68 = arith.cmpi sge, %66, %67 : vector<8x16xi32>
    %69 = arith.cmpi sle, %66, %61 : vector<8x16xi32>
    %70 = arith.andi %68, %69 : vector<8x16xi1>
    %71 = arith.subi %61, %66 : vector<8x16xi32>
    %c4_i32 = arith.constant 4 : i32
    %72 = vector.broadcast %c4_i32 : i32 to vector<8x16xi32>
    %73 = arith.cmpi sle, %71, %72 : vector<8x16xi32>
    %74 = arith.andi %70, %73 : vector<8x16xi1>
    %c0_31 = arith.constant 0 : index
    %c0_32 = arith.constant 0 : index
    %c0_33 = arith.constant 0 : index
    %c0_34 = arith.constant 0 : index
    %75 = vector.load %arg14[%c0_31, %c0_32, %c0_33, %c0_34] : memref<1x1x1x16xf32, #tpu.memory_space<vmem>>, vector<1x1x1x16xf32>
    %76 = vector.shape_cast %75 : vector<1x1x1x16xf32> to vector<1x16xf32>
    %cst_35 = arith.constant 5.000000e-01 : f32
    %77 = vector.broadcast %cst_35 : f32 to vector<1x16xf32>
    %78 = arith.cmpf olt, %76, %77 : vector<1x16xf32>
    %79 = vector.broadcast %78 : vector<1x16xi1> to vector<8x16xi1>
    %80 = arith.andi %74, %79 : vector<8x16xi1>
    %cst_36 = arith.constant 0.000000e+00 : f32
    %81 = vector.broadcast %cst_36 : f32 to vector<8x32xf32>
    %c0_i32_37 = arith.constant 0 : i32
    %82 = arith.index_cast %c0_i32_37 : i32 to index
    %c0_38 = arith.constant 0 : index
    %c0_39 = arith.constant 0 : index
    %83 = vector.load %arg7[%82, %c0_38, %c0_39] : memref<4x32x16xbf16, #tpu.memory_space<vmem>>, vector<1x32x16xbf16>
    %84 = vector.shape_cast %83 : vector<1x32x16xbf16> to vector<32x16xbf16>
    %cst_40 = arith.constant dense<0.000000e+00> : vector<8x16xf32>
    %85 = tpu.matmul %30, %84, %cst_40 {dimension_numbers = #tpu.dot_dimension_numbers<[1], [0], [0], [1], [0, 0, 1, 1], [], []>} : vector<8x32xbf16>, vector<32x16xbf16>, vector<8x16xf32> -> vector<8x16xf32>
    %86 = arith.index_cast %c0_i32_37 : i32 to index
    %c0_41 = arith.constant 0 : index
    %c0_42 = arith.constant 0 : index
    %87 = vector.load %arg8[%86, %c0_41, %c0_42] : memref<4x32x16xbf16, #tpu.memory_space<vmem>>, vector<1x32x16xbf16>
    %88 = vector.shape_cast %87 : vector<1x32x16xbf16> to vector<32x16xbf16>
    %cst_43 = arith.constant dense<0.000000e+00> : vector<16x16xf32>
    %89 = tpu.matmul %57, %88, %cst_43 {dimension_numbers = #tpu.dot_dimension_numbers<[1], [0], [0], [1], [0, 0, 1, 1], [], []>} : vector<16x32xbf16>, vector<32x16xbf16>, vector<16x16xf32> -> vector<16x16xf32>
    %90 = arith.truncf %85 : vector<8x16xf32> to vector<8x16xbf16>
    %91 = arith.truncf %89 : vector<16x16xf32> to vector<16x16xbf16>
    %cst_44 = arith.constant dense<0.000000e+00> : vector<8x16xf32>
    %92 = tpu.matmul %90, %91, %cst_44 {dimension_numbers = #tpu.dot_dimension_numbers<[1], [1], [0], [0], [0, 0, 1, 0], [], []>} : vector<8x16xbf16>, vector<16x16xbf16>, vector<8x16xf32> -> vector<8x16xf32>
    %cst_45 = arith.constant -1.000000e+30 : f32
    %93 = vector.broadcast %cst_45 : f32 to vector<8x16xf32>
    %94 = arith.select %80, %92, %93 : vector<8x16xi1>, vector<8x16xf32>
    %cst_46 = arith.constant dense<0xFF800000> : vector<8xf32>
    %95 = vector.multi_reduction <maximumf>, %94, %cst_46 [1] : vector<8x16xf32> to vector<8xf32>
    %96 = vector.shape_cast %95 : vector<8xf32> to vector<8x1xf32>
    %97 = vector.broadcast %96 : vector<8x1xf32> to vector<8x16xf32>
    %98 = arith.subf %94, %97 : vector<8x16xf32>
    %99 = math.exp %98 : vector<8x16xf32>
    %cst_47 = arith.constant dense<0.000000e+00> : vector<8xf32>
    %100 = vector.multi_reduction <add>, %99, %cst_47 [1] : vector<8x16xf32> to vector<8xf32>
    %101 = vector.shape_cast %100 : vector<8xf32> to vector<8x1xf32>
    %102 = vector.broadcast %101 : vector<8x1xf32> to vector<8x16xf32>
    %103 = arith.divf %99, %102 : vector<8x16xf32>
    %104 = arith.truncf %103 : vector<8x16xf32> to vector<8x16xbf16>
    %cst_48 = arith.constant dense<0.000000e+00> : vector<8x32xf32>
    %105 = tpu.matmul %104, %57, %cst_48 {dimension_numbers = #tpu.dot_dimension_numbers<[1], [0], [0], [1], [0, 0, 1, 1], [], []>} : vector<8x16xbf16>, vector<16x32xbf16>, vector<8x32xf32> -> vector<8x32xf32>
    %106 = arith.truncf %105 : vector<8x32xf32> to vector<8x32xbf16>
    %107 = arith.index_cast %c0_i32_37 : i32 to index
    %c0_49 = arith.constant 0 : index
    %c0_50 = arith.constant 0 : index
    %108 = vector.load %arg9[%107, %c0_49, %c0_50] : memref<4x32x32xbf16, #tpu.memory_space<vmem>>, vector<1x32x32xbf16>
    %109 = vector.shape_cast %108 : vector<1x32x32xbf16> to vector<32x32xbf16>
    %cst_51 = arith.constant dense<0.000000e+00> : vector<8x32xf32>
    %110 = tpu.matmul %106, %109, %cst_51 {dimension_numbers = #tpu.dot_dimension_numbers<[1], [0], [0], [1], [0, 0, 1, 1], [], []>} : vector<8x32xbf16>, vector<32x32xbf16>, vector<8x32xf32> -> vector<8x32xf32>
    %111 = arith.addf %81, %110 : vector<8x32xf32>
    %c1_i32_52 = arith.constant 1 : i32
    %112 = arith.index_cast %c1_i32_52 : i32 to index
    %c0_53 = arith.constant 0 : index
    %c0_54 = arith.constant 0 : index
    %113 = vector.load %arg7[%112, %c0_53, %c0_54] : memref<4x32x16xbf16, #tpu.memory_space<vmem>>, vector<1x32x16xbf16>
    %114 = vector.shape_cast %113 : vector<1x32x16xbf16> to vector<32x16xbf16>
    %cst_55 = arith.constant dense<0.000000e+00> : vector<8x16xf32>
    %115 = tpu.matmul %30, %114, %cst_55 {dimension_numbers = #tpu.dot_dimension_numbers<[1], [0], [0], [1], [0, 0, 1, 1], [], []>} : vector<8x32xbf16>, vector<32x16xbf16>, vector<8x16xf32> -> vector<8x16xf32>
    %116 = arith.index_cast %c1_i32_52 : i32 to index
    %c0_56 = arith.constant 0 : index
    %c0_57 = arith.constant 0 : index
    %117 = vector.load %arg8[%116, %c0_56, %c0_57] : memref<4x32x16xbf16, #tpu.memory_space<vmem>>, vector<1x32x16xbf16>
    %118 = vector.shape_cast %117 : vector<1x32x16xbf16> to vector<32x16xbf16>
    %cst_58 = arith.constant dense<0.000000e+00> : vector<16x16xf32>
    %119 = tpu.matmul %57, %118, %cst_58 {dimension_numbers = #tpu.dot_dimension_numbers<[1], [0], [0], [1], [0, 0, 1, 1], [], []>} : vector<16x32xbf16>, vector<32x16xbf16>, vector<16x16xf32> -> vector<16x16xf32>
    %120 = arith.truncf %115 : vector<8x16xf32> to vector<8x16xbf16>
    %121 = arith.truncf %119 : vector<16x16xf32> to vector<16x16xbf16>
    %cst_59 = arith.constant dense<0.000000e+00> : vector<8x16xf32>
    %122 = tpu.matmul %120, %121, %cst_59 {dimension_numbers = #tpu.dot_dimension_numbers<[1], [1], [0], [0], [0, 0, 1, 0], [], []>} : vector<8x16xbf16>, vector<16x16xbf16>, vector<8x16xf32> -> vector<8x16xf32>
    %cst_60 = arith.constant -1.000000e+30 : f32
    %123 = vector.broadcast %cst_60 : f32 to vector<8x16xf32>
    %124 = arith.select %80, %122, %123 : vector<8x16xi1>, vector<8x16xf32>
    %cst_61 = arith.constant dense<0xFF800000> : vector<8xf32>
    %125 = vector.multi_reduction <maximumf>, %124, %cst_61 [1] : vector<8x16xf32> to vector<8xf32>
    %126 = vector.shape_cast %125 : vector<8xf32> to vector<8x1xf32>
    %127 = vector.broadcast %126 : vector<8x1xf32> to vector<8x16xf32>
    %128 = arith.subf %124, %127 : vector<8x16xf32>
    %129 = math.exp %128 : vector<8x16xf32>
    %cst_62 = arith.constant dense<0.000000e+00> : vector<8xf32>
    %130 = vector.multi_reduction <add>, %129, %cst_62 [1] : vector<8x16xf32> to vector<8xf32>
    %131 = vector.shape_cast %130 : vector<8xf32> to vector<8x1xf32>
    %132 = vector.broadcast %131 : vector<8x1xf32> to vector<8x16xf32>
    %133 = arith.divf %129, %132 : vector<8x16xf32>
    %134 = arith.truncf %133 : vector<8x16xf32> to vector<8x16xbf16>
    %cst_63 = arith.constant dense<0.000000e+00> : vector<8x32xf32>
    %135 = tpu.matmul %134, %57, %cst_63 {dimension_numbers = #tpu.dot_dimension_numbers<[1], [0], [0], [1], [0, 0, 1, 1], [], []>} : vector<8x16xbf16>, vector<16x32xbf16>, vector<8x32xf32> -> vector<8x32xf32>
    %136 = arith.truncf %135 : vector<8x32xf32> to vector<8x32xbf16>
    %137 = arith.index_cast %c1_i32_52 : i32 to index
    %c0_64 = arith.constant 0 : index
    %c0_65 = arith.constant 0 : index
    %138 = vector.load %arg9[%137, %c0_64, %c0_65] : memref<4x32x32xbf16, #tpu.memory_space<vmem>>, vector<1x32x32xbf16>
    %139 = vector.shape_cast %138 : vector<1x32x32xbf16> to vector<32x32xbf16>
    %cst_66 = arith.constant dense<0.000000e+00> : vector<8x32xf32>
    %140 = tpu.matmul %136, %139, %cst_66 {dimension_numbers = #tpu.dot_dimension_numbers<[1], [0], [0], [1], [0, 0, 1, 1], [], []>} : vector<8x32xbf16>, vector<32x32xbf16>, vector<8x32xf32> -> vector<8x32xf32>
    %141 = arith.addf %111, %140 : vector<8x32xf32>
    %c2_i32 = arith.constant 2 : i32
    %142 = arith.index_cast %c2_i32 : i32 to index
    %c0_67 = arith.constant 0 : index
    %c0_68 = arith.constant 0 : index
    %143 = vector.load %arg7[%142, %c0_67, %c0_68] : memref<4x32x16xbf16, #tpu.memory_space<vmem>>, vector<1x32x16xbf16>
    %144 = vector.shape_cast %143 : vector<1x32x16xbf16> to vector<32x16xbf16>
    %cst_69 = arith.constant dense<0.000000e+00> : vector<8x16xf32>
    %145 = tpu.matmul %30, %144, %cst_69 {dimension_numbers = #tpu.dot_dimension_numbers<[1], [0], [0], [1], [0, 0, 1, 1], [], []>} : vector<8x32xbf16>, vector<32x16xbf16>, vector<8x16xf32> -> vector<8x16xf32>
    %146 = arith.index_cast %c2_i32 : i32 to index
    %c0_70 = arith.constant 0 : index
    %c0_71 = arith.constant 0 : index
    %147 = vector.load %arg8[%146, %c0_70, %c0_71] : memref<4x32x16xbf16, #tpu.memory_space<vmem>>, vector<1x32x16xbf16>
    %148 = vector.shape_cast %147 : vector<1x32x16xbf16> to vector<32x16xbf16>
    %cst_72 = arith.constant dense<0.000000e+00> : vector<16x16xf32>
    %149 = tpu.matmul %57, %148, %cst_72 {dimension_numbers = #tpu.dot_dimension_numbers<[1], [0], [0], [1], [0, 0, 1, 1], [], []>} : vector<16x32xbf16>, vector<32x16xbf16>, vector<16x16xf32> -> vector<16x16xf32>
    %150 = arith.truncf %145 : vector<8x16xf32> to vector<8x16xbf16>
    %151 = arith.truncf %149 : vector<16x16xf32> to vector<16x16xbf16>
    %cst_73 = arith.constant dense<0.000000e+00> : vector<8x16xf32>
    %152 = tpu.matmul %150, %151, %cst_73 {dimension_numbers = #tpu.dot_dimension_numbers<[1], [1], [0], [0], [0, 0, 1, 0], [], []>} : vector<8x16xbf16>, vector<16x16xbf16>, vector<8x16xf32> -> vector<8x16xf32>
    %cst_74 = arith.constant -1.000000e+30 : f32
    %153 = vector.broadcast %cst_74 : f32 to vector<8x16xf32>
    %154 = arith.select %80, %152, %153 : vector<8x16xi1>, vector<8x16xf32>
    %cst_75 = arith.constant dense<0xFF800000> : vector<8xf32>
    %155 = vector.multi_reduction <maximumf>, %154, %cst_75 [1] : vector<8x16xf32> to vector<8xf32>
    %156 = vector.shape_cast %155 : vector<8xf32> to vector<8x1xf32>
    %157 = vector.broadcast %156 : vector<8x1xf32> to vector<8x16xf32>
    %158 = arith.subf %154, %157 : vector<8x16xf32>
    %159 = math.exp %158 : vector<8x16xf32>
    %cst_76 = arith.constant dense<0.000000e+00> : vector<8xf32>
    %160 = vector.multi_reduction <add>, %159, %cst_76 [1] : vector<8x16xf32> to vector<8xf32>
    %161 = vector.shape_cast %160 : vector<8xf32> to vector<8x1xf32>
    %162 = vector.broadcast %161 : vector<8x1xf32> to vector<8x16xf32>
    %163 = arith.divf %159, %162 : vector<8x16xf32>
    %164 = arith.truncf %163 : vector<8x16xf32> to vector<8x16xbf16>
    %cst_77 = arith.constant dense<0.000000e+00> : vector<8x32xf32>
    %165 = tpu.matmul %164, %57, %cst_77 {dimension_numbers = #tpu.dot_dimension_numbers<[1], [0], [0], [1], [0, 0, 1, 1], [], []>} : vector<8x16xbf16>, vector<16x32xbf16>, vector<8x32xf32> -> vector<8x32xf32>
    %166 = arith.truncf %165 : vector<8x32xf32> to vector<8x32xbf16>
    %167 = arith.index_cast %c2_i32 : i32 to index
    %c0_78 = arith.constant 0 : index
    %c0_79 = arith.constant 0 : index
    %168 = vector.load %arg9[%167, %c0_78, %c0_79] : memref<4x32x32xbf16, #tpu.memory_space<vmem>>, vector<1x32x32xbf16>
    %169 = vector.shape_cast %168 : vector<1x32x32xbf16> to vector<32x32xbf16>
    %cst_80 = arith.constant dense<0.000000e+00> : vector<8x32xf32>
    %170 = tpu.matmul %166, %169, %cst_80 {dimension_numbers = #tpu.dot_dimension_numbers<[1], [0], [0], [1], [0, 0, 1, 1], [], []>} : vector<8x32xbf16>, vector<32x32xbf16>, vector<8x32xf32> -> vector<8x32xf32>
    %171 = arith.addf %141, %170 : vector<8x32xf32>
    %c3_i32 = arith.constant 3 : i32
    %172 = arith.index_cast %c3_i32 : i32 to index
    %c0_81 = arith.constant 0 : index
    %c0_82 = arith.constant 0 : index
    %173 = vector.load %arg7[%172, %c0_81, %c0_82] : memref<4x32x16xbf16, #tpu.memory_space<vmem>>, vector<1x32x16xbf16>
    %174 = vector.shape_cast %173 : vector<1x32x16xbf16> to vector<32x16xbf16>
    %cst_83 = arith.constant dense<0.000000e+00> : vector<8x16xf32>
    %175 = tpu.matmul %30, %174, %cst_83 {dimension_numbers = #tpu.dot_dimension_numbers<[1], [0], [0], [1], [0, 0, 1, 1], [], []>} : vector<8x32xbf16>, vector<32x16xbf16>, vector<8x16xf32> -> vector<8x16xf32>
    %176 = arith.index_cast %c3_i32 : i32 to index
    %c0_84 = arith.constant 0 : index
    %c0_85 = arith.constant 0 : index
    %177 = vector.load %arg8[%176, %c0_84, %c0_85] : memref<4x32x16xbf16, #tpu.memory_space<vmem>>, vector<1x32x16xbf16>
    %178 = vector.shape_cast %177 : vector<1x32x16xbf16> to vector<32x16xbf16>
    %cst_86 = arith.constant dense<0.000000e+00> : vector<16x16xf32>
    %179 = tpu.matmul %57, %178, %cst_86 {dimension_numbers = #tpu.dot_dimension_numbers<[1], [0], [0], [1], [0, 0, 1, 1], [], []>} : vector<16x32xbf16>, vector<32x16xbf16>, vector<16x16xf32> -> vector<16x16xf32>
    %180 = arith.truncf %175 : vector<8x16xf32> to vector<8x16xbf16>
    %181 = arith.truncf %179 : vector<16x16xf32> to vector<16x16xbf16>
    %cst_87 = arith.constant dense<0.000000e+00> : vector<8x16xf32>
    %182 = tpu.matmul %180, %181, %cst_87 {dimension_numbers = #tpu.dot_dimension_numbers<[1], [1], [0], [0], [0, 0, 1, 0], [], []>} : vector<8x16xbf16>, vector<16x16xbf16>, vector<8x16xf32> -> vector<8x16xf32>
    %cst_88 = arith.constant -1.000000e+30 : f32
    %183 = vector.broadcast %cst_88 : f32 to vector<8x16xf32>
    %184 = arith.select %80, %182, %183 : vector<8x16xi1>, vector<8x16xf32>
    %cst_89 = arith.constant dense<0xFF800000> : vector<8xf32>
    %185 = vector.multi_reduction <maximumf>, %184, %cst_89 [1] : vector<8x16xf32> to vector<8xf32>
    %186 = vector.shape_cast %185 : vector<8xf32> to vector<8x1xf32>
    %187 = vector.broadcast %186 : vector<8x1xf32> to vector<8x16xf32>
    %188 = arith.subf %184, %187 : vector<8x16xf32>
    %189 = math.exp %188 : vector<8x16xf32>
    %cst_90 = arith.constant dense<0.000000e+00> : vector<8xf32>
    %190 = vector.multi_reduction <add>, %189, %cst_90 [1] : vector<8x16xf32> to vector<8xf32>
    %191 = vector.shape_cast %190 : vector<8xf32> to vector<8x1xf32>
    %192 = vector.broadcast %191 : vector<8x1xf32> to vector<8x16xf32>
    %193 = arith.divf %189, %192 : vector<8x16xf32>
    %194 = arith.truncf %193 : vector<8x16xf32> to vector<8x16xbf16>
    %cst_91 = arith.constant dense<0.000000e+00> : vector<8x32xf32>
    %195 = tpu.matmul %194, %57, %cst_91 {dimension_numbers = #tpu.dot_dimension_numbers<[1], [0], [0], [1], [0, 0, 1, 1], [], []>} : vector<8x16xbf16>, vector<16x32xbf16>, vector<8x32xf32> -> vector<8x32xf32>
    %196 = arith.truncf %195 : vector<8x32xf32> to vector<8x32xbf16>
    %197 = arith.index_cast %c3_i32 : i32 to index
    %c0_92 = arith.constant 0 : index
    %c0_93 = arith.constant 0 : index
    %198 = vector.load %arg9[%197, %c0_92, %c0_93] : memref<4x32x32xbf16, #tpu.memory_space<vmem>>, vector<1x32x32xbf16>
    %199 = vector.shape_cast %198 : vector<1x32x32xbf16> to vector<32x32xbf16>
    %cst_94 = arith.constant dense<0.000000e+00> : vector<8x32xf32>
    %200 = tpu.matmul %196, %199, %cst_94 {dimension_numbers = #tpu.dot_dimension_numbers<[1], [0], [0], [1], [0, 0, 1, 1], [], []>} : vector<8x32xbf16>, vector<32x32xbf16>, vector<8x32xf32> -> vector<8x32xf32>
    %201 = arith.addf %171, %200 : vector<8x32xf32>
    %c4_i32_95 = arith.constant 4 : i32
    %202 = arith.addf %1, %201 : vector<8x32xf32>
    %c0_96 = arith.constant 0 : index
    %c0_97 = arith.constant 0 : index
    %203 = vector.load %arg5[%c0_96, %c0_97] : memref<1x32xf32, #tpu.memory_space<vmem>>, vector<1x32xf32>
    %204 = arith.mulf %202, %202 : vector<8x32xf32>
    %cst_98 = arith.constant dense<0.000000e+00> : vector<8xf32>
    %205 = vector.multi_reduction <add>, %204, %cst_98 [1] : vector<8x32xf32> to vector<8xf32>
    %206 = vector.shape_cast %205 : vector<8xf32> to vector<8x1xf32>
    %cst_99 = arith.constant 3.200000e+01 : f32
    %207 = vector.broadcast %cst_99 : f32 to vector<8x1xf32>
    %208 = arith.divf %206, %207 : vector<8x1xf32>
    %cst_100 = arith.constant 1.1920929E-7 : f32
    %209 = vector.broadcast %cst_100 : f32 to vector<8x1xf32>
    %210 = arith.addf %208, %209 : vector<8x1xf32>
    %211 = math.rsqrt %210 : vector<8x1xf32>
    %212 = vector.broadcast %211 : vector<8x1xf32> to vector<8x32xf32>
    %213 = arith.mulf %202, %212 : vector<8x32xf32>
    %214 = vector.broadcast %203 : vector<1x32xf32> to vector<8x32xf32>
    %215 = arith.mulf %213, %214 : vector<8x32xf32>
    %216 = arith.truncf %215 : vector<8x32xf32> to vector<8x32xbf16>
    %c0_101 = arith.constant 0 : index
    %c0_102 = arith.constant 0 : index
    %217 = vector.load %arg15[%c0_101, %c0_102] : memref<32x128xbf16, #tpu.memory_space<vmem>>, vector<32x128xbf16>
    %cst_103 = arith.constant dense<0.000000e+00> : vector<8x128xf32>
    %218 = tpu.matmul %216, %217, %cst_103 {dimension_numbers = #tpu.dot_dimension_numbers<[1], [0], [0], [1], [0, 0, 1, 1], [], []>} : vector<8x32xbf16>, vector<32x128xbf16>, vector<8x128xf32> -> vector<8x128xf32>
    %c0_104 = arith.constant 0 : index
    %c0_105 = arith.constant 0 : index
    %219 = vector.load %arg16[%c0_104, %c0_105] : memref<32x128xbf16, #tpu.memory_space<vmem>>, vector<32x128xbf16>
    %cst_106 = arith.constant dense<0.000000e+00> : vector<8x128xf32>
    %220 = tpu.matmul %216, %219, %cst_106 {dimension_numbers = #tpu.dot_dimension_numbers<[1], [0], [0], [1], [0, 0, 1, 1], [], []>} : vector<8x32xbf16>, vector<32x128xbf16>, vector<8x128xf32> -> vector<8x128xf32>
    %221 = arith.negf %218 : vector<8x128xf32>
    %222 = math.exp %221 : vector<8x128xf32>
    %cst_107 = arith.constant 1.000000e+00 : f32
    %223 = vector.broadcast %cst_107 : f32 to vector<8x128xf32>
    %224 = arith.addf %223, %222 : vector<8x128xf32>
    %225 = arith.divf %223, %224 : vector<8x128xf32>
    %226 = arith.mulf %218, %225 : vector<8x128xf32>
    %227 = arith.mulf %226, %220 : vector<8x128xf32>
    %228 = arith.truncf %227 : vector<8x128xf32> to vector<8x128xbf16>
    %c0_108 = arith.constant 0 : index
    %c0_109 = arith.constant 0 : index
    %229 = vector.load %arg17[%c0_108, %c0_109] : memref<128x32xbf16, #tpu.memory_space<vmem>>, vector<128x32xbf16>
    %cst_110 = arith.constant dense<0.000000e+00> : vector<8x32xf32>
    %230 = tpu.matmul %228, %229, %cst_110 {dimension_numbers = #tpu.dot_dimension_numbers<[1], [0], [0], [1], [0, 0, 1, 1], [], []>} : vector<8x128xbf16>, vector<128x32xbf16>, vector<8x32xf32> -> vector<8x32xf32>
    %231 = arith.addf %202, %230 : vector<8x32xf32>
    %c0_111 = arith.constant 0 : index
    %c0_112 = arith.constant 0 : index
    %c0_113 = arith.constant 0 : index
    %232 = vector.load %arg18[%c0_111, %c0_112, %c0_113] : memref<1x8x32xf32, #tpu.memory_space<vmem>>, vector<1x8x32xf32>
    %233 = vector.shape_cast %232 : vector<1x8x32xf32> to vector<8x32xf32>
    %234 = vector.shape_cast %231 : vector<8x32xf32> to vector<1x8x32xf32>
    tpu.vector_store %arg18[%c0_111, %c0_112, %c0_113], %234 {strides = array<i32>} : memref<1x8x32xf32, #tpu.memory_space<vmem>>, vector<1x8x32xf32>,
    return
  }
  func.func @transform_0(%arg0: i32, %arg1: i32) -> (i32, i32, i32) {
    %c0_i32 = arith.constant 0 : i32
    %c0_i32_0 = arith.constant 0 : i32
    return %arg0, %arg1, %c0_i32 : i32, i32, i32
  }
  func.func @transform_1(%arg0: i32, %arg1: i32) -> (i32, i32, i32) {
    %c1_i32 = arith.constant 1 : i32
    %0 = arith.subi %arg1, %c1_i32 : i32
    %c0_i32 = arith.constant 0 : i32
    %1 = arith.maxsi %0, %c0_i32 : i32
    %c0_i32_0 = arith.constant 0 : i32
    %c0_i32_1 = arith.constant 0 : i32
    return %arg0, %1, %c0_i32_0 : i32, i32, i32
  }
  func.func @transform_2(%arg0: i32, %arg1: i32) -> (i32, i32) {
    %c0_i32 = arith.constant 0 : i32
    %c0_i32_0 = arith.constant 0 : i32
    %c0_i32_1 = arith.constant 0 : i32
    return %c0_i32, %c0_i32_0 : i32, i32
  }
  func.func @transform_3(%arg0: i32, %arg1: i32) -> (i32, i32) {
    %c0_i32 = arith.constant 0 : i32
    %c0_i32_0 = arith.constant 0 : i32
    %c0_i32_1 = arith.constant 0 : i32
    return %c0_i32, %c0_i32_0 : i32, i32
  }
  func.func @transform_4(%arg0: i32, %arg1: i32) -> (i32, i32) {
    %c0_i32 = arith.constant 0 : i32
    %c0_i32_0 = arith.constant 0 : i32
    %c0_i32_1 = arith.constant 0 : i32
    return %c0_i32, %c0_i32_0 : i32, i32
  }
  func.func @transform_5(%arg0: i32, %arg1: i32) -> (i32, i32, i32) {
    %c0_i32 = arith.constant 0 : i32
    %c0_i32_0 = arith.constant 0 : i32
    %c0_i32_1 = arith.constant 0 : i32
    %c0_i32_2 = arith.constant 0 : i32
    return %c0_i32, %c0_i32_0, %c0_i32_1 : i32, i32, i32
  }
  func.func @transform_6(%arg0: i32, %arg1: i32) -> (i32, i32, i32) {
    %c0_i32 = arith.constant 0 : i32
    %c0_i32_0 = arith.constant 0 : i32
    %c0_i32_1 = arith.constant 0 : i32
    %c0_i32_2 = arith.constant 0 : i32
    return %c0_i32, %c0_i32_0, %c0_i32_1 : i32, i32, i32
  }
  func.func @transform_7(%arg0: i32, %arg1: i32) -> (i32, i32, i32) {
    %c0_i32 = arith.constant 0 : i32
    %c0_i32_0 = arith.constant 0 : i32
    %c0_i32_1 = arith.constant 0 : i32
    %c0_i32_2 = arith.constant 0 : i32
    return %c0_i32, %c0_i32_0, %c0_i32_1 : i32, i32, i32
  }
  func.func @transform_8(%arg0: i32, %arg1: i32) -> (i32, i32) {
    %c0_i32 = arith.constant 0 : i32
    %c0_i32_0 = arith.constant 0 : i32
    return %arg1, %c0_i32 : i32, i32
  }
  func.func @transform_9(%arg0: i32, %arg1: i32) -> (i32, i32) {
    %c0_i32 = arith.constant 0 : i32
    %c0_i32_0 = arith.constant 0 : i32
    return %arg1, %c0_i32 : i32, i32
  }
  func.func @transform_10(%arg0: i32, %arg1: i32) -> (i32, i32) {
    %c1_i32 = arith.constant 1 : i32
    %0 = arith.subi %arg1, %c1_i32 : i32
    %c0_i32 = arith.constant 0 : i32
    %1 = arith.maxsi %0, %c0_i32 : i32
    %c0_i32_0 = arith.constant 0 : i32
    %c0_i32_1 = arith.constant 0 : i32
    return %1, %c0_i32_0 : i32, i32
  }
  func.func @transform_11(%arg0: i32, %arg1: i32) -> (i32, i32) {
    %c1_i32 = arith.constant 1 : i32
    %0 = arith.subi %arg1, %c1_i32 : i32
    %c0_i32 = arith.constant 0 : i32
    %1 = arith.maxsi %0, %c0_i32 : i32
    %c0_i32_0 = arith.constant 0 : i32
    %c0_i32_1 = arith.constant 0 : i32
    return %1, %c0_i32_0 : i32, i32
  }
  func.func @transform_12(%arg0: i32, %arg1: i32) -> (i32, i32, i32, i32) {
    %c0_i32 = arith.constant 0 : i32
    %c0_i32_0 = arith.constant 0 : i32
    %c0_i32_1 = arith.constant 0 : i32
    return %arg0, %arg1, %c0_i32, %c0_i32_0 : i32, i32, i32, i32
  }
  func.func @transform_13(%arg0: i32, %arg1: i32) -> (i32, i32) {
    %c0_i32 = arith.constant 0 : i32
    %c0_i32_0 = arith.constant 0 : i32
    %c0_i32_1 = arith.constant 0 : i32
    return %c0_i32, %c0_i32_0 : i32, i32
  }
  func.func @transform_14(%arg0: i32, %arg1: i32) -> (i32, i32) {
    %c0_i32 = arith.constant 0 : i32
    %c0_i32_0 = arith.constant 0 : i32
    %c0_i32_1 = arith.constant 0 : i32
    return %c0_i32, %c0_i32_0 : i32, i32
  }
  func.func @transform_15(%arg0: i32, %arg1: i32) -> (i32, i32) {
    %c0_i32 = arith.constant 0 : i32
    %c0_i32_0 = arith.constant 0 : i32
    %c0_i32_1 = arith.constant 0 : i32
    return %c0_i32, %c0_i32_0 : i32, i32
  }
  func.func @transform_16(%arg0: i32, %arg1: i32) -> (i32, i32, i32) {
    %c0_i32 = arith.constant 0 : i32
    %c0_i32_0 = arith.constant 0 : i32
    return %arg0, %arg1, %c0_i32 : i32, i32, i32
  }
}

</mosaic_0001>

<llo_original>
// kernel: transformer_block.1
$region0: #{transformer_block.1}
  #allocation0 [shape = 'u32[]', space=smem, size = 0x4, offset = 0x4, fixed_abs, tag = 'smem constant byte address 0x4 - core index']
  #allocation1 [shape = 'u32[72,128]{1,0:T(1,128)}', space=vmem, size = 0x9000, scoped, tag = 'internal scratch']
  %s0 = inlined_call_operand.vmem [shape: f32[2,16,32], index: 0, kind: input, shape index: {}, may-alias: {0,1}]
  %s1 = inlined_call_operand.vmem [shape: f32[2,16,32], index: 1, kind: input, shape index: {}, may-alias: {0,1}]
  %s2 = inlined_call_operand.vmem [shape: f32[1,32], index: 2, kind: input, shape index: {}]
  %s3 = inlined_call_operand.vmem [shape: f32[1,32], index: 3, kind: input, shape index: {}]
  %s4 = inlined_call_operand.vmem [shape: bf16[32,32], index: 4, kind: input, shape index: {}]
  %s5 = inlined_call_operand.vmem [shape: bf16[4,32,16], index: 5, kind: input, shape index: {}]
  %s6 = inlined_call_operand.vmem [shape: bf16[4,32,16], index: 6, kind: input, shape index: {}]
  %s7 = inlined_call_operand.vmem [shape: bf16[4,32,32], index: 7, kind: input, shape index: {}]
  %s8 = inlined_call_operand.vmem [shape: f32[16,32], index: 8, kind: input, shape index: {}, may-alias: {8,10}]
  %s9 = inlined_call_operand.vmem [shape: f32[16,32], index: 9, kind: input, shape index: {}, may-alias: {9,11}]
  %s10 = inlined_call_operand.vmem [shape: f32[16,32], index: 10, kind: input, shape index: {}, may-alias: {8,10}]
  %s11 = inlined_call_operand.vmem [shape: f32[16,32], index: 11, kind: input, shape index: {}, may-alias: {9,11}]
  %s12 = inlined_call_operand.vmem [shape: f32[2,2,1,16], index: 12, kind: input, shape index: {}]
  %s13 = inlined_call_operand.vmem [shape: bf16[32,128], index: 13, kind: input, shape index: {}]
  %s14 = inlined_call_operand.vmem [shape: bf16[32,128], index: 14, kind: input, shape index: {}]
  %s15 = inlined_call_operand.vmem [shape: bf16[128,32], index: 15, kind: input, shape index: {}]
  %s16 = inlined_call_operand.hbm [shape: f32[2,16,32], index: 16, kind: output, shape index: {}]
  %s17 = sld [smem:[#allocation0]]
  $region97: #{transformer_block.1} parent=0
    _
  %s19 = ssub.s32 1, %s17
  %s20 = scalar_select 0, %s19, %s17
  $region1: #{transformer_block.1} parent=0
    #allocation2 [shape = 'u8[8192]{0}', space=vmem, size = 0x2000, scoped, tag = 'output window, operand 0']
    #allocation3 [shape = 's32[2]{0}', space=sflag, size = 0x8, scoped, tag = 'scoped memory for transformer_block.1']
    %21 = vsyncpa [#allocation3], 0
    %s22 = scalar_lea.sflag [#allocation3], 1
    %23 = vsyncpa %s22, 0
    loop: start=0, step=1, limit=6
    $region2: #{transformer_block.1} parent=1 // loop_pre_header
      _
    $region3: #{transformer_block.1} parent=1 // loop_header
      %s25 = sphi 0, %s29
      %p26 = scmp.ge.s32.totalorder %s25, 6
      %s32 = sphi 0, %s44
      %s33 = sphi 0, %s40
      %s34 = sphi 0, %s32
      %s35 = sphi 0, %s33
      %s36 = sphi 0, %s34
      %s37 = sphi 0, %s35
      %s49 = sphi 0, %s51
      %s52 = sphi 0, %s49
      %s53 = sphi 0, %s52
      %s69 = sphi 0, %s53
      %s83 = sphi 0, %s85
      %s86 = sphi 0, %s83
      %s87 = sphi 0, %s86
      %s103 = sphi 0, %s87
      %s107 = sphi 0, %s107
      %s109 = sphi 0, %s107
      %s110 = sphi 0, %s109
      %s124 = sphi 0, %s110
      %s128 = sphi 0, %s128
      %s130 = sphi 0, %s128
      %s131 = sphi 0, %s130
      %s145 = sphi 0, %s131
      %s149 = sphi 0, %s149
      %s151 = sphi 0, %s149
      %s152 = sphi 0, %s151
      %s166 = sphi 0, %s152
      %s170 = sphi 0, %s170
      %s172 = sphi 0, %s170
      %s173 = sphi 0, %s172
      %s187 = sphi 0, %s173
      %s191 = sphi 0, %s191
      %s193 = sphi 0, %s191
      %s194 = sphi 0, %s193
      %s208 = sphi 0, %s194
      %s212 = sphi 0, %s212
      %s214 = sphi 0, %s212
      %s215 = sphi 0, %s214
      %s229 = sphi 0, %s215
      %s235 = sphi 0, %s237
      %s238 = sphi 0, %s235
      %s239 = sphi 0, %s238
      %s255 = sphi 0, %s239
      %s261 = sphi 0, %s263
      %s264 = sphi 0, %s261
      %s265 = sphi 0, %s264
      %s281 = sphi 0, %s265
      %s293 = sphi 0, %s295
      %s296 = sphi 0, %s293
      %s297 = sphi 0, %s296
      %s313 = sphi 0, %s297
      %s325 = sphi 0, %s327
      %s328 = sphi 0, %s325
      %s329 = sphi 0, %s328
      %s345 = sphi 0, %s329
      %s353 = sphi 0, %s355
      %s356 = sphi 0, %s353
      %s357 = sphi 0, %s356
      %s373 = sphi 0, %s357
      %s377 = sphi 0, %s377
      %s379 = sphi 0, %s377
      %s380 = sphi 0, %s379
      %s394 = sphi 0, %s380
      %s398 = sphi 0, %s398
      %s400 = sphi 0, %s398
      %s401 = sphi 0, %s400
      %s415 = sphi 0, %s401
      %s419 = sphi 0, %s419
      %s421 = sphi 0, %s419
      %s422 = sphi 0, %s421
      %s436 = sphi 0, %s422
      %s444 = sphi 0, %s446
      %s447 = sphi 0, %s444
      %s448 = sphi 0, %s447
      %s464 = sphi 0, %s448
    $region4: #{transformer_block.1} parent=1 // loop_header_branch
      %28 = sbr.rel (%p26) target = $region8
    $region5: #{transformer_block.1} parent=1 // loop_body
      %s30 = ssub.s32 %s25, 1
      %s31 = ssub.s32 %s25, 2
      %s38 = sadd.s32 1, %s33
      %p39 = scmp.ge.s32.totalorder %s38, 2
      %s40 = scalar_select %p39, 0, %s38
      %s41 = sadd.s32 1, %s32
      %s42 = scalar_select %p39, %s41, %s32
      %p43 = scmp.ge.s32.totalorder %s42, 2
      %s44 = scalar_select %p43, 0, %s42
      %s45 = ssub.s32 %s32, %s44
      %s46 = ssub.s32 %s33, %s40
      %s47 = sor.u32 %s45, %s46
      %p48 = scmp.eq.s32.totalorder %s47, 0
      %s50 = sadd.s32 %s49, 1
      %s51 = scalar_select %p48, %s49, %s50
      %p54 = pneg %p48
      %p55 = scmp.eq.s32.totalorder %s25, 3
      %p56 = por %p54, %p55
      %p57 = scmp.ne.s32.totalorder %s49, %s52
      %p58 = scmp.eq.s32.totalorder %s25, 0
      %p59 = por %p57, %p58
      %p60 = scmp.ne.s32.totalorder %s49, %s52
      %p61 = scmp.eq.s32.totalorder %s30, 3
      %p62 = por %p60, %p61
      %p63 = scmp.ne.s32.totalorder %s52, %s53
      %p64 = scmp.eq.s32.totalorder %s30, 0
      %p65 = por %p63, %p64
      %p66 = scmp.ne.s32.totalorder %s52, %s53
      %p67 = scmp.eq.s32.totalorder %s31, 3
      %p68 = por %p66, %p67
      %p70 = scmp.ne.s32.totalorder %s53, %s69
      %p71 = scmp.eq.s32.totalorder %s31, 0
      %p72 = por %p70, %p71
      %s73 = ssub.s32 %s33, 1
      %p74 = scmp.gt.s32.totalorder %s73, 0
      %s75 = scalar_select %p74, %s73, 0
      %s76 = ssub.s32 %s40, 1
      %p77 = scmp.gt.s32.totalorder %s76, 0
      %s78 = scalar_select %p77, %s76, 0
      %s79 = ssub.s32 %s32, %s44
      %s80 = ssub.s32 %s75, %s78
      %s81 = sor.u32 %s79, %s80
      %p82 = scmp.eq.s32.totalorder %s81, 0
      %s84 = sadd.s32 %s83, 1
      %s85 = scalar_select %p82, %s83, %s84
      %p88 = pneg %p82
      %p89 = scmp.eq.s32.totalorder %s25, 3
      %p90 = por %p88, %p89
      %p91 = scmp.ne.s32.totalorder %s83, %s86
      %p92 = scmp.eq.s32.totalorder %s25, 0
      %p93 = por %p91, %p92
      %p94 = scmp.ne.s32.totalorder %s83, %s86
      %p95 = scmp.eq.s32.totalorder %s30, 3
      %p96 = por %p94, %p95
      %p97 = scmp.ne.s32.totalorder %s86, %s87
      %p98 = scmp.eq.s32.totalorder %s30, 0
      %p99 = por %p97, %p98
      %p100 = scmp.ne.s32.totalorder %s86, %s87
      %p101 = scmp.eq.s32.totalorder %s31, 3
      %p102 = por %p100, %p101
      %p104 = scmp.ne.s32.totalorder %s87, %s103
      %p105 = scmp.eq.s32.totalorder %s31, 0
      %p106 = por %p104, %p105
      %s108 = sadd.s32 %s107, 1
      %p111 = scmp.eq.s32.totalorder %s25, 3
      %p112 = scmp.ne.s32.totalorder %s107, %s109
      %p113 = scmp.eq.s32.totalorder %s25, 0
      %p114 = por %p112, %p113
      %p115 = scmp.ne.s32.totalorder %s107, %s109
      %p116 = scmp.eq.s32.totalorder %s30, 3
      %p117 = por %p115, %p116
      %p118 = scmp.ne.s32.totalorder %s109, %s110
      %p119 = scmp.eq.s32.totalorder %s30, 0
      %p120 = por %p118, %p119
      %p121 = scmp.ne.s32.totalorder %s109, %s110
      %p122 = scmp.eq.s32.totalorder %s31, 3
      %p123 = por %p121, %p122
      %p125 = scmp.ne.s32.totalorder %s110, %s124
      %p126 = scmp.eq.s32.totalorder %s31, 0
      %p127 = por %p125, %p126
      %s129 = sadd.s32 %s128, 1
      %p132 = scmp.eq.s32.totalorder %s25, 3
      %p133 = scmp.ne.s32.totalorder %s128, %s130
      %p134 = scmp.eq.s32.totalorder %s25, 0
      %p135 = por %p133, %p134
      %p136 = scmp.ne.s32.totalorder %s128, %s130
      %p137 = scmp.eq.s32.totalorder %s30, 3
      %p138 = por %p136, %p137
      %p139 = scmp.ne.s32.totalorder %s130, %s131
      %p140 = scmp.eq.s32.totalorder %s30, 0
      %p141 = por %p139, %p140
      %p142 = scmp.ne.s32.totalorder %s130, %s131
      %p143 = scmp.eq.s32.totalorder %s31, 3
      %p144 = por %p142, %p143
      %p146 = scmp.ne.s32.totalorder %s131, %s145
      %p147 = scmp.eq.s32.totalorder %s31, 0
      %p148 = por %p146, %p147
      %s150 = sadd.s32 %s149, 1
      %p153 = scmp.eq.s32.totalorder %s25, 3
      %p154 = scmp.ne.s32.totalorder %s149, %s151
      %p155 = scmp.eq.s32.totalorder %s25, 0
      %p156 = por %p154, %p155
      %p157 = scmp.ne.s32.totalorder %s149, %s151
      %p158 = scmp.eq.s32.totalorder %s30, 3
      %p159 = por %p157, %p158
      %p160 = scmp.ne.s32.totalorder %s151, %s152
      %p161 = scmp.eq.s32.totalorder %s30, 0
      %p162 = por %p160, %p161
      %p163 = scmp.ne.s32.totalorder %s151, %s152
      %p164 = scmp.eq.s32.totalorder %s31, 3
      %p165 = por %p163, %p164
      %p167 = scmp.ne.s32.totalorder %s152, %s166
      %p168 = scmp.eq.s32.totalorder %s31, 0
      %p169 = por %p167, %p168
      %s171 = sadd.s32 %s170, 1
      %p174 = scmp.eq.s32.totalorder %s25, 3
      %p175 = scmp.ne.s32.totalorder %s170, %s172
      %p176 = scmp.eq.s32.totalorder %s25, 0
      %p177 = por %p175, %p176
      %p178 = scmp.ne.s32.totalorder %s170, %s172
      %p179 = scmp.eq.s32.totalorder %s30, 3
      %p180 = por %p178, %p179
      %p181 = scmp.ne.s32.totalorder %s172, %s173
      %p182 = scmp.eq.s32.totalorder %s30, 0
      %p183 = por %p181, %p182
      %p184 = scmp.ne.s32.totalorder %s172, %s173
      %p185 = scmp.eq.s32.totalorder %s31, 3
      %p186 = por %p184, %p185
      %p188 = scmp.ne.s32.totalorder %s173, %s187
      %p189 = scmp.eq.s32.totalorder %s31, 0
      %p190 = por %p188, %p189
      %s192 = sadd.s32 %s191, 1
      %p195 = scmp.eq.s32.totalorder %s25, 3
      %p196 = scmp.ne.s32.totalorder %s191, %s193
      %p197 = scmp.eq.s32.totalorder %s25, 0
      %p198 = por %p196, %p197
      %p199 = scmp.ne.s32.totalorder %s191, %s193
      %p200 = scmp.eq.s32.totalorder %s30, 3
      %p201 = por %p199, %p200
      %p202 = scmp.ne.s32.totalorder %s193, %s194
      %p203 = scmp.eq.s32.totalorder %s30, 0
      %p204 = por %p202, %p203
      %p205 = scmp.ne.s32.totalorder %s193, %s194
      %p206 = scmp.eq.s32.totalorder %s31, 3
      %p207 = por %p205, %p206
      %p209 = scmp.ne.s32.totalorder %s194, %s208
      %p210 = scmp.eq.s32.totalorder %s31, 0
      %p211 = por %p209, %p210
      %s213 = sadd.s32 %s212, 1
      %p216 = scmp.eq.s32.totalorder %s25, 3
      %p217 = scmp.ne.s32.totalorder %s212, %s214
      %p218 = scmp.eq.s32.totalorder %s25, 0
      %p219 = por %p217, %p218
      %p220 = scmp.ne.s32.totalorder %s212, %s214
      %p221 = scmp.eq.s32.totalorder %s30, 3
      %p222 = por %p220, %p221
      %p223 = scmp.ne.s32.totalorder %s214, %s215
      %p224 = scmp.eq.s32.totalorder %s30, 0
      %p225 = por %p223, %p224
      %p226 = scmp.ne.s32.totalorder %s214, %s215
      %p227 = scmp.eq.s32.totalorder %s31, 3
      %p228 = por %p226, %p227
      %p230 = scmp.ne.s32.totalorder %s215, %s229
      %p231 = scmp.eq.s32.totalorder %s31, 0
      %p232 = por %p230, %p231
      %s233 = ssub.s32 %s33, %s40
      %p234 = scmp.eq.s32.totalorder %s233, 0
      %s236 = sadd.s32 %s235, 1
      %s237 = scalar_select %p234, %s235, %s236
      %p240 = pneg %p234
      %p241 = scmp.eq.s32.totalorder %s25, 3
      %p242 = por %p240, %p241
      %p243 = scmp.ne.s32.totalorder %s235, %s238
      %p244 = scmp.eq.s32.totalorder %s25, 0
      %p245 = por %p243, %p244
      %p246 = scmp.ne.s32.totalorder %s235, %s238
      %p247 = scmp.eq.s32.totalorder %s30, 3
      %p248 = por %p246, %p247
      %p249 = scmp.ne.s32.totalorder %s238, %s239
      %p250 = scmp.eq.s32.totalorder %s30, 0
      %p251 = por %p249, %p250
      %p252 = scmp.ne.s32.totalorder %s238, %s239
      %p253 = scmp.eq.s32.totalorder %s31, 3
      %p254 = por %p252, %p253
      %p256 = scmp.ne.s32.totalorder %s239, %s255
      %p257 = scmp.eq.s32.totalorder %s31, 0
      %p258 = por %p256, %p257
      %s259 = ssub.s32 %s33, %s40
      %p260 = scmp.eq.s32.totalorder %s259, 0
      %s262 = sadd.s32 %s261, 1
      %s263 = scalar_select %p260, %s261, %s262
      %p266 = pneg %p260
      %p267 = scmp.eq.s32.totalorder %s25, 3
      %p268 = por %p266, %p267
      %p269 = scmp.ne.s32.totalorder %s261, %s264
      %p270 = scmp.eq.s32.totalorder %s25, 0
      %p271 = por %p269, %p270
      %p272 = scmp.ne.s32.totalorder %s261, %s264
      %p273 = scmp.eq.s32.totalorder %s30, 3
      %p274 = por %p272, %p273
      %p275 = scmp.ne.s32.totalorder %s264, %s265
      %p276 = scmp.eq.s32.totalorder %s30, 0
      %p277 = por %p275, %p276
      %p278 = scmp.ne.s32.totalorder %s264, %s265
      %p279 = scmp.eq.s32.totalorder %s31, 3
      %p280 = por %p278, %p279
      %p282 = scmp.ne.s32.totalorder %s265, %s281
      %p283 = scmp.eq.s32.totalorder %s31, 0
      %p284 = por %p282, %p283
      %s285 = ssub.s32 %s33, 1
      %p286 = scmp.gt.s32.totalorder %s285, 0
      %s287 = scalar_select %p286, %s285, 0
      %s288 = ssub.s32 %s40, 1
      %p289 = scmp.gt.s32.totalorder %s288, 0
      %s290 = scalar_select %p289, %s288, 0
      %s291 = ssub.s32 %s287, %s290
      %p292 = scmp.eq.s32.totalorder %s291, 0
      %s294 = sadd.s32 %s293, 1
      %s295 = scalar_select %p292, %s293, %s294
      %p298 = pneg %p292
      %p299 = scmp.eq.s32.totalorder %s25, 3
      %p300 = por %p298, %p299
      %p301 = scmp.ne.s32.totalorder %s293, %s296
      %p302 = scmp.eq.s32.totalorder %s25, 0
      %p303 = por %p301, %p302
      %p304 = scmp.ne.s32.totalorder %s293, %s296
      %p305 = scmp.eq.s32.totalorder %s30, 3
      %p306 = por %p304, %p305
      %p307 = scmp.ne.s32.totalorder %s296, %s297
      %p308 = scmp.eq.s32.totalorder %s30, 0
      %p309 = por %p307, %p308
      %p310 = scmp.ne.s32.totalorder %s296, %s297
      %p311 = scmp.eq.s32.totalorder %s31, 3
      %p312 = por %p310, %p311
      %p314 = scmp.ne.s32.totalorder %s297, %s313
      %p315 = scmp.eq.s32.totalorder %s31, 0
      %p316 = por %p314, %p315
      %s317 = ssub.s32 %s33, 1
      %p318 = scmp.gt.s32.totalorder %s317, 0
      %s319 = scalar_select %p318, %s317, 0
      %s320 = ssub.s32 %s40, 1
      %p321 = scmp.gt.s32.totalorder %s320, 0
      %s322 = scalar_select %p321, %s320, 0
      %s323 = ssub.s32 %s319, %s322
      %p324 = scmp.eq.s32.totalorder %s323, 0
      %s326 = sadd.s32 %s325, 1
      %s327 = scalar_select %p324, %s325, %s326
      %p330 = pneg %p324
      %p331 = scmp.eq.s32.totalorder %s25, 3
      %p332 = por %p330, %p331
      %p333 = scmp.ne.s32.totalorder %s325, %s328
      %p334 = scmp.eq.s32.totalorder %s25, 0
      %p335 = por %p333, %p334
      %p336 = scmp.ne.s32.totalorder %s325, %s328
      %p337 = scmp.eq.s32.totalorder %s30, 3
      %p338 = por %p336, %p337
      %p339 = scmp.ne.s32.totalorder %s328, %s329
      %p340 = scmp.eq.s32.totalorder %s30, 0
      %p341 = por %p339, %p340
      %p342 = scmp.ne.s32.totalorder %s328, %s329
      %p343 = scmp.eq.s32.totalorder %s31, 3
      %p344 = por %p342, %p343
      %p346 = scmp.ne.s32.totalorder %s329, %s345
      %p347 = scmp.eq.s32.totalorder %s31, 0
      %p348 = por %p346, %p347
      %s349 = ssub.s32 %s32, %s44
      %s350 = ssub.s32 %s33, %s40
      %s351 = sor.u32 %s349, %s350
      %p352 = scmp.eq.s32.totalorder %s351, 0
      %s354 = sadd.s32 %s353, 1
      %s355 = scalar_select %p352, %s353, %s354
      %p358 = pneg %p352
      %p359 = scmp.eq.s32.totalorder %s25, 3
      %p360 = por %p358, %p359
      %p361 = scmp.ne.s32.totalorder %s353, %s356
      %p362 = scmp.eq.s32.totalorder %s25, 0
      %p363 = por %p361, %p362
      %p364 = scmp.ne.s32.totalorder %s353, %s356
      %p365 = scmp.eq.s32.totalorder %s30, 3
      %p366 = por %p364, %p365
      %p367 = scmp.ne.s32.totalorder %s356, %s357
      %p368 = scmp.eq.s32.totalorder %s30, 0
      %p369 = por %p367, %p368
      %p370 = scmp.ne.s32.totalorder %s356, %s357
      %p371 = scmp.eq.s32.totalorder %s31, 3
      %p372 = por %p370, %p371
      %p374 = scmp.ne.s32.totalorder %s357, %s373
      %p375 = scmp.eq.s32.totalorder %s31, 0
      %p376 = por %p374, %p375
      %s378 = sadd.s32 %s377, 1
      %p381 = scmp.eq.s32.totalorder %s25, 3
      %p382 = scmp.ne.s32.totalorder %s377, %s379
      %p383 = scmp.eq.s32.totalorder %s25, 0
      %p384 = por %p382, %p383
      %p385 = scmp.ne.s32.totalorder %s377, %s379
      %p386 = scmp.eq.s32.totalorder %s30, 3
      %p387 = por %p385, %p386
      %p388 = scmp.ne.s32.totalorder %s379, %s380
      %p389 = scmp.eq.s32.totalorder %s30, 0
      %p390 = por %p388, %p389
      %p391 = scmp.ne.s32.totalorder %s379, %s380
      %p392 = scmp.eq.s32.totalorder %s31, 3
      %p393 = por %p391, %p392
      %p395 = scmp.ne.s32.totalorder %s380, %s394
      %p396 = scmp.eq.s32.totalorder %s31, 0
      %p397 = por %p395, %p396
      %s399 = sadd.s32 %s398, 1
      %p402 = scmp.eq.s32.totalorder %s25, 3
      %p403 = scmp.ne.s32.totalorder %s398, %s400
      %p404 = scmp.eq.s32.totalorder %s25, 0
      %p405 = por %p403, %p404
      %p406 = scmp.ne.s32.totalorder %s398, %s400
      %p407 = scmp.eq.s32.totalorder %s30, 3
      %p408 = por %p406, %p407
      %p409 = scmp.ne.s32.totalorder %s400, %s401
      %p410 = scmp.eq.s32.totalorder %s30, 0
      %p411 = por %p409, %p410
      %p412 = scmp.ne.s32.totalorder %s400, %s401
      %p413 = scmp.eq.s32.totalorder %s31, 3
      %p414 = por %p412, %p413
      %p416 = scmp.ne.s32.totalorder %s401, %s415
      %p417 = scmp.eq.s32.totalorder %s31, 0
      %p418 = por %p416, %p417
      %s420 = sadd.s32 %s419, 1
      %p423 = scmp.eq.s32.totalorder %s25, 3
      %p424 = scmp.ne.s32.totalorder %s419, %s421
      %p425 = scmp.eq.s32.totalorder %s25, 0
      %p426 = por %p424, %p425
      %p427 = scmp.ne.s32.totalorder %s419, %s421
      %p428 = scmp.eq.s32.totalorder %s30, 3
      %p429 = por %p427, %p428
      %p430 = scmp.ne.s32.totalorder %s421, %s422
      %p431 = scmp.eq.s32.totalorder %s30, 0
      %p432 = por %p430, %p431
      %p433 = scmp.ne.s32.totalorder %s421, %s422
      %p434 = scmp.eq.s32.totalorder %s31, 3
      %p435 = por %p433, %p434
      %p437 = scmp.ne.s32.totalorder %s422, %s436
      %p438 = scmp.eq.s32.totalorder %s31, 0
      %p439 = por %p437, %p438
      %s440 = ssub.s32 %s32, %s44
      %s441 = ssub.s32 %s33, %s40
      %s442 = sor.u32 %s440, %s441
      %p443 = scmp.eq.s32.totalorder %s442, 0
      %s445 = sadd.s32 %s444, 1
      %s446 = scalar_select %p443, %s444, %s445
      %p449 = pneg %p443
      %p450 = scmp.eq.s32.totalorder %s25, 3
      %p451 = por %p449, %p450
      %p452 = scmp.ne.s32.totalorder %s444, %s447
      %p453 = scmp.eq.s32.totalorder %s25, 0
      %p454 = por %p452, %p453
      %p455 = scmp.ne.s32.totalorder %s444, %s447
      %p456 = scmp.eq.s32.totalorder %s30, 3
      %p457 = por %p455, %p456
      %p458 = scmp.ne.s32.totalorder %s447, %s448
      %p459 = scmp.eq.s32.totalorder %s30, 0
      %p460 = por %p458, %p459
      %p461 = scmp.ne.s32.totalorder %s447, %s448
      %p462 = scmp.eq.s32.totalorder %s31, 3
      %p463 = por %p461, %p462
      %p465 = scmp.ne.s32.totalorder %s448, %s464
      %p466 = scmp.eq.s32.totalorder %s31, 0
      %p467 = por %p465, %p466
      %p468 = scmp.le.s32.totalorder 1, %s25
      %p469 = scmp.lt.s32.totalorder %s25, 5
      %p470 = pnand %p468, %p469
      %p471 = pneg %p470
      // Predicated region
      $region9: #{transformer_block.1} parent=5 // pred_check
        _
      $region10: #{transformer_block.1} parent=5 // pred_check_branch
        %473 = sbr.rel (%p470) target = $region12
      $region11: #{transformer_block.1} parent=5 // pred_region
        %s474 = ssub.s32 %s25, 1
        // Predicated region
        $region13: #{transformer_block.1} parent=11 // pred_check
          %p475 = pneg %p120
        $region14: #{transformer_block.1} parent=11 // pred_check_branch
          %477 = sbr.rel (%p475) target = $region16
        $region15: #{transformer_block.1} parent=11 // pred_region
          _
        $region16: #{transformer_block.1} parent=11 // pred_fallthru
          _
        // Predicated region
        $region17: #{transformer_block.1} parent=11 // pred_check
          %p478 = pneg %p141
        $region18: #{transformer_block.1} parent=11 // pred_check_branch
          %480 = sbr.rel (%p478) target = $region20
        $region19: #{transformer_block.1} parent=11 // pred_region
          _
        $region20: #{transformer_block.1} parent=11 // pred_fallthru
          _
        // Predicated region
        $region21: #{transformer_block.1} parent=11 // pred_check
          %p481 = pneg %p162
        $region22: #{transformer_block.1} parent=11 // pred_check_branch
          %483 = sbr.rel (%p481) target = $region24
        $region23: #{transformer_block.1} parent=11 // pred_region
          _
        $region24: #{transformer_block.1} parent=11 // pred_fallthru
          _
        // Predicated region
        $region25: #{transformer_block.1} parent=11 // pred_check
          %p484 = pneg %p183
        $region26: #{transformer_block.1} parent=11 // pred_check_branch
          %486 = sbr.rel (%p484) target = $region28
        $region27: #{transformer_block.1} parent=11 // pred_region
          _
        $region28: #{transformer_block.1} parent=11 // pred_fallthru
          _
        // Predicated region
        $region29: #{transformer_block.1} parent=11 // pred_check
          %p487 = pneg %p204
        $region30: #{transformer_block.1} parent=11 // pred_check_branch
          %489 = sbr.rel (%p487) target = $region32
        $region31: #{transformer_block.1} parent=11 // pred_region
          _
        $region32: #{transformer_block.1} parent=11 // pred_fallthru
          _
        // Predicated region
        $region33: #{transformer_block.1} parent=11 // pred_check
          %p490 = pneg %p225
        $region34: #{transformer_block.1} parent=11 // pred_check_branch
          %492 = sbr.rel (%p490) target = $region36
        $region35: #{transformer_block.1} parent=11 // pred_region
          _
        $region36: #{transformer_block.1} parent=11 // pred_fallthru
          _
        // Predicated region
        $region37: #{transformer_block.1} parent=11 // pred_check
          %p493 = pneg %p390
        $region38: #{transformer_block.1} parent=11 // pred_check_branch
          %495 = sbr.rel (%p493) target = $region40
        $region39: #{transformer_block.1} parent=11 // pred_region
          _
        $region40: #{transformer_block.1} parent=11 // pred_fallthru
          _
        // Predicated region
        $region41: #{transformer_block.1} parent=11 // pred_check
          %p496 = pneg %p411
        $region42: #{transformer_block.1} parent=11 // pred_check_branch
          %498 = sbr.rel (%p496) target = $region44
        $region43: #{transformer_block.1} parent=11 // pred_region
          _
        $region44: #{transformer_block.1} parent=11 // pred_fallthru
          _
        // Predicated region
        $region45: #{transformer_block.1} parent=11 // pred_check
          %p499 = pneg %p432
        $region46: #{transformer_block.1} parent=11 // pred_check_branch
          %501 = sbr.rel (%p499) target = $region48
        $region47: #{transformer_block.1} parent=11 // pred_region
          _
        $region48: #{transformer_block.1} parent=11 // pred_fallthru
          _
      $region12: #{transformer_block.1} parent=5 // pred_fallthru
        _
      %p502 = scmp.lt.s32.totalorder %s25, 4
      // Predicated region
      $region49: #{transformer_block.1} parent=5 // pred_check
        %p503 = pneg %p502
      $region50: #{transformer_block.1} parent=5 // pred_check_branch
        %505 = sbr.rel (%p503) target = $region52
      $region51: #{transformer_block.1} parent=5 // pred_region
        // Predicated region
        $region53: #{transformer_block.1} parent=51 // pred_check
          %p506 = pneg %p59
        $region54: #{transformer_block.1} parent=51 // pred_check_branch
          %508 = sbr.rel (%p506) target = $region56
        $region55: #{transformer_block.1} parent=51 // pred_region
          %p509 = scmp.lt.s32.totalorder %s32, 1
          %s510 = scalar_select %p509, %s32, 1
          %p511 = scmp.lt.s32.totalorder %s33, 1
          %s512 = scalar_select %p511, %s33, 1
          %s513 = smul.addr %s510, 2
          %s514 = sadd.s32 %s512, %s513
          %s515 = smul.addr %s514, 8
          %s516 = scalar_lea.vmem %s0, %s515
        $region56: #{transformer_block.1} parent=51 // pred_fallthru
          _
        // Predicated region
        $region57: #{transformer_block.1} parent=51 // pred_check
          %p517 = pneg %p93
        $region58: #{transformer_block.1} parent=51 // pred_check_branch
          %519 = sbr.rel (%p517) target = $region60
        $region59: #{transformer_block.1} parent=51 // pred_region
          %s520 = ssub.s32 %s33, 1
          %p521 = scmp.gt.s32.totalorder %s520, 0
          %s522 = scalar_select %p521, %s520, 0
          %p523 = scmp.lt.s32.totalorder %s32, 1
          %s524 = scalar_select %p523, %s32, 1
          %p525 = scmp.lt.s32.totalorder %s522, 1
          %s526 = scalar_select %p525, %s522, 1
          %s527 = smul.addr %s524, 2
          %s528 = sadd.s32 %s526, %s527
          %s529 = smul.addr %s528, 8
          %s530 = scalar_lea.vmem %s1, %s529
          %s531 = ssub.s32 %s33, 1
          %p532 = scmp.gt.s32.totalorder %s531, 0
          %s533 = scalar_select %p532, %s531, 0
        $region60: #{transformer_block.1} parent=51 // pred_fallthru
          _
        // Predicated region
        $region61: #{transformer_block.1} parent=51 // pred_check
          %p534 = pneg %p245
        $region62: #{transformer_block.1} parent=51 // pred_check_branch
          %536 = sbr.rel (%p534) target = $region64
        $region63: #{transformer_block.1} parent=51 // pred_region
          %p537 = scmp.lt.s32.totalorder %s33, 1
          %s538 = scalar_select %p537, %s33, 1
          %s539 = smul.addr %s538, 8
          %s540 = scalar_lea.vmem %s8, %s539
        $region64: #{transformer_block.1} parent=51 // pred_fallthru
          _
        // Predicated region
        $region65: #{transformer_block.1} parent=51 // pred_check
          %p541 = pneg %p271
        $region66: #{transformer_block.1} parent=51 // pred_check_branch
          %543 = sbr.rel (%p541) target = $region68
        $region67: #{transformer_block.1} parent=51 // pred_region
          %p544 = scmp.lt.s32.totalorder %s33, 1
          %s545 = scalar_select %p544, %s33, 1
          %s546 = smul.addr %s545, 8
          %s547 = scalar_lea.vmem %s9, %s546
        $region68: #{transformer_block.1} parent=51 // pred_fallthru
          _
        // Predicated region
        $region69: #{transformer_block.1} parent=51 // pred_check
          %p548 = pneg %p303
        $region70: #{transformer_block.1} parent=51 // pred_check_branch
          %550 = sbr.rel (%p548) target = $region72
        $region71: #{transformer_block.1} parent=51 // pred_region
          %s551 = ssub.s32 %s33, 1
          %p552 = scmp.gt.s32.totalorder %s551, 0
          %s553 = scalar_select %p552, %s551, 0
          %p554 = scmp.lt.s32.totalorder %s553, 1
          %s555 = scalar_select %p554, %s553, 1
          %s556 = smul.addr %s555, 8
          %s557 = scalar_lea.vmem %s10, %s556
          %s558 = ssub.s32 %s33, 1
          %p559 = scmp.gt.s32.totalorder %s558, 0
          %s560 = scalar_select %p559, %s558, 0
        $region72: #{transformer_block.1} parent=51 // pred_fallthru
          _
        // Predicated region
        $region73: #{transformer_block.1} parent=51 // pred_check
          %p561 = pneg %p335
        $region74: #{transformer_block.1} parent=51 // pred_check_branch
          %563 = sbr.rel (%p561) target = $region76
        $region75: #{transformer_block.1} parent=51 // pred_region
          %s564 = ssub.s32 %s33, 1
          %p565 = scmp.gt.s32.totalorder %s564, 0
          %s566 = scalar_select %p565, %s564, 0
          %p567 = scmp.lt.s32.totalorder %s566, 1
          %s568 = scalar_select %p567, %s566, 1
          %s569 = smul.addr %s568, 8
          %s570 = scalar_lea.vmem %s11, %s569
          %s571 = ssub.s32 %s33, 1
          %p572 = scmp.gt.s32.totalorder %s571, 0
          %s573 = scalar_select %p572, %s571, 0
        $region76: #{transformer_block.1} parent=51 // pred_fallthru
          _
        // Predicated region
        $region77: #{transformer_block.1} parent=51 // pred_check
          %p574 = pneg %p363
        $region78: #{transformer_block.1} parent=51 // pred_check_branch
          %576 = sbr.rel (%p574) target = $region80
        $region79: #{transformer_block.1} parent=51 // pred_region
          %p577 = scmp.lt.s32.totalorder %s32, 1
          %s578 = scalar_select %p577, %s32, 1
          %p579 = scmp.lt.s32.totalorder %s33, 1
          %s580 = scalar_select %p579, %s33, 1
          %s581 = smul.addr %s578, 2
          %s582 = sadd.s32 %s580, %s581
          %s583 = scalar_lea.vmem %s12, %s582
        $region80: #{transformer_block.1} parent=51 // pred_fallthru
          _
      $region52: #{transformer_block.1} parent=5 // pred_fallthru
        _
      %p584 = scmp.le.s32.totalorder 1, %s25
      %p585 = scmp.lt.s32.totalorder %s25, 5
      %p586 = pnand %p584, %p585
      %p587 = pneg %p586
      // Predicated region
      $region81: #{transformer_block.1} parent=5 // pred_check
        _
      $region82: #{transformer_block.1} parent=5 // pred_check_branch
        %589 = sbr.rel (%p586) target = $region84
      $region83: #{transformer_block.1} parent=5 // pred_region
        %s590 = ssub.s32 %s25, 1
        %p591 = scmp.lt.s32.totalorder %s34, 1
        %s592 = scalar_select %p591, %s34, 1
        %p593 = scmp.lt.s32.totalorder %s35, 1
        %s594 = scalar_select %p593, %s35, 1
        %s595 = smul.addr %s592, 2
        %s596 = sadd.s32 %s594, %s595
        %s597 = smul.addr %s596, 8
        %s598 = scalar_lea.vmem %s0, %s597
        %p599 = pneg %p65
        %p600 = pneg %p62
        %s601 = ssub.s32 %s35, 1
        %p602 = scmp.gt.s32.totalorder %s601, 0
        %s603 = scalar_select %p602, %s601, 0
        %p604 = scmp.lt.s32.totalorder %s34, 1
        %s605 = scalar_select %p604, %s34, 1
        %p606 = scmp.lt.s32.totalorder %s603, 1
        %s607 = scalar_select %p606, %s603, 1
        %s608 = smul.addr %s605, 2
        %s609 = sadd.s32 %s607, %s608
        %s610 = smul.addr %s609, 8
        %s611 = scalar_lea.vmem %s1, %s610
        %p612 = pneg %p99
        %p613 = pneg %p96
        %p614 = pneg %p120
        %p615 = pneg %p117
        %p616 = pneg %p141
        %p617 = pneg %p138
        %p618 = pneg %p162
        %p619 = pneg %p159
        %p620 = pneg %p183
        %p621 = pneg %p180
        %p622 = pneg %p204
        %p623 = pneg %p201
        %p624 = pneg %p225
        %p625 = pneg %p222
        %p626 = scmp.lt.s32.totalorder %s35, 1
        %s627 = scalar_select %p626, %s35, 1
        %s628 = smul.addr %s627, 8
        %s629 = scalar_lea.vmem %s8, %s628
        %p630 = pneg %p251
        %p631 = pneg %p248
        %p632 = scmp.lt.s32.totalorder %s35, 1
        %s633 = scalar_select %p632, %s35, 1
        %s634 = smul.addr %s633, 8
        %s635 = scalar_lea.vmem %s9, %s634
        %p636 = pneg %p277
        %p637 = pneg %p274
        %s638 = ssub.s32 %s35, 1
        %p639 = scmp.gt.s32.totalorder %s638, 0
        %s640 = scalar_select %p639, %s638, 0
        %p641 = scmp.lt.s32.totalorder %s640, 1
        %s642 = scalar_select %p641, %s640, 1
        %s643 = smul.addr %s642, 8
        %s644 = scalar_lea.vmem %s10, %s643
        %p645 = pneg %p309
        %p646 = pneg %p306
        %s647 = ssub.s32 %s35, 1
        %p648 = scmp.gt.s32.totalorder %s647, 0
        %s649 = scalar_select %p648, %s647, 0
        %p650 = scmp.lt.s32.totalorder %s649, 1
        %s651 = scalar_select %p650, %s649, 1
        %s652 = smul.addr %s651, 8
        %s653 = scalar_lea.vmem %s11, %s652
        %p654 = pneg %p341
        %p655 = pneg %p338
        %p656 = scmp.lt.s32.totalorder %s34, 1
        %s657 = scalar_select %p656, %s34, 1
        %p658 = scmp.lt.s32.totalorder %s35, 1
        %s659 = scalar_select %p658, %s35, 1
        %s660 = smul.addr %s657, 2
        %s661 = sadd.s32 %s659, %s660
        %s662 = scalar_lea.vmem %s12, %s661
        %p663 = pneg %p369
        %p664 = pneg %p366
        %p665 = pneg %p390
        %p666 = pneg %p387
        %p667 = pneg %p411
        %p668 = pneg %p408
        %p669 = pneg %p432
        %p670 = pneg %p429
        %p671 = pneg %p460
        %p672 = pneg %p457
        %s673 = sand.u32 %s447, 1
        %s674 = scalar_lea.sflag [#allocation3], %s673
        %s675 = sand.u32 %s447, 1
        %s676 = smul.addr %s675, 8
        %s677 = scalar_lea.vmem [#allocation2], %s676
        %p678 = scmp.lt.s32.totalorder %s34, 1
        %s679 = scalar_select %p678, %s34, 1
        %p680 = scmp.lt.s32.totalorder %s35, 1
        %s681 = scalar_select %p680, %s35, 1
        %s682 = smul.addr %s679, 2
        %s683 = sadd.s32 %s681, %s682
        %s684 = smul.addr %s683, 8
        %s685 = scalar_lea.vmem %s0, %s684
        %s686 = ssub.s32 %s35, 1
        %p687 = scmp.gt.s32.totalorder %s686, 0
        %s688 = scalar_select %p687, %s686, 0
        %p689 = scmp.lt.s32.totalorder %s34, 1
        %s690 = scalar_select %p689, %s34, 1
        %p691 = scmp.lt.s32.totalorder %s688, 1
        %s692 = scalar_select %p691, %s688, 1
        %s693 = smul.addr %s690, 2
        %s694 = sadd.s32 %s692, %s693
        %s695 = smul.addr %s694, 8
        %s696 = scalar_lea.vmem %s1, %s695
        %s697 = ssub.s32 %s35, 1
        %p698 = scmp.gt.s32.totalorder %s697, 0
        %s699 = scalar_select %p698, %s697, 0
        %p700 = scmp.lt.s32.totalorder %s35, 1
        %s701 = scalar_select %p700, %s35, 1
        %s702 = smul.addr %s701, 8
        %s703 = scalar_lea.vmem %s8, %s702
        %p704 = scmp.lt.s32.totalorder %s35, 1
        %s705 = scalar_select %p704, %s35, 1
        %s706 = smul.addr %s705, 8
        %s707 = scalar_lea.vmem %s9, %s706
        %s708 = ssub.s32 %s35, 1
        %p709 = scmp.gt.s32.totalorder %s708, 0
        %s710 = scalar_select %p709, %s708, 0
        %p711 = scmp.lt.s32.totalorder %s710, 1
        %s712 = scalar_select %p711, %s710, 1
        %s713 = smul.addr %s712, 8
        %s714 = scalar_lea.vmem %s10, %s713
        %s715 = ssub.s32 %s35, 1
        %p716 = scmp.gt.s32.totalorder %s715, 0
        %s717 = scalar_select %p716, %s715, 0
        %s718 = ssub.s32 %s35, 1
        %p719 = scmp.gt.s32.totalorder %s718, 0
        %s720 = scalar_select %p719, %s718, 0
        %p721 = scmp.lt.s32.totalorder %s720, 1
        %s722 = scalar_select %p721, %s720, 1
        %s723 = smul.addr %s722, 8
        %s724 = scalar_lea.vmem %s11, %s723
        %s725 = ssub.s32 %s35, 1
        %p726 = scmp.gt.s32.totalorder %s725, 0
        %s727 = scalar_select %p726, %s725, 0
        %p728 = scmp.lt.s32.totalorder %s34, 1
        %s729 = scalar_select %p728, %s34, 1
        %p730 = scmp.lt.s32.totalorder %s35, 1
        %s731 = scalar_select %p730, %s35, 1
        %s732 = smul.addr %s729, 2
        %s733 = sadd.s32 %s731, %s732
        %s734 = scalar_lea.vmem %s12, %s733
        %v736 = vld [vmem:[%s685] sm:$0xff]
        %v737 = vld [vmem:[%s696] sm:$0xff]
        %v738 = vld [vmem:[%s2] sm:$0x1]
        %v739 = vmul.f32 %v736, %v736
        %vm740 = vcmask 261120
        %v741 = vsel %vm740, %v739, 0.0
        %742 = vadd.xlane.f32.xlu0 %v741
        %v743 = vpop.xlane.xlu0 %742
        %v744 = vrcp.pop 32.0
        %v745 = vmul.f32 32.0, %v744
        %v746 = vsub.f32 1.0, %v745
        %v747 = vmul.f32 %v744, %v746
        %v748 = vadd.f32 %v744, %v747
        %vm749 = vweird.f32 %v744
        %v750 = vsel %vm749, %v744, %v748
        %v751 = vmul.f32 %v743, %v750
        %v752 = vadd.f32 %v751, 1.1920929e-07
        %v753 = vrsqrt.pop %v752
        %v754 = vmul.f32 %v753, %v752
        %v755 = vmul.f32 %v754, %v753
        %v756 = vmul.f32 0.5, %v755
        %v757 = vsub.f32 1.5, %v756
        %v758 = vmul.f32 %v753, %v757
        %vm759 = vweird.f32 %v752
        %vm760 = vweird.f32 %v753
        %vm761 = vmor %vm759, %vm760
        %v762 = vsel %vm761, %v753, %v758
        %v763 = vmul.f32 %v736, %v762
        %v765 = vperm.slane %v738, 0
        %v767 = vmul.f32 %v763, %v765
        %v768 = vmul.f32 %v737, %v737
        %v769 = vsel %vm740, %v768, 0.0
        %770 = vadd.xlane.f32.xlu0 %v769
        %v771 = vpop.xlane.xlu0 %770
        %v772 = vmul.f32 %v771, %v750
        %v773 = vadd.f32 %v772, 1.1920929e-07
        %v774 = vrsqrt.pop %v773
        %v775 = vmul.f32 %v774, %v773
        %v776 = vmul.f32 %v775, %v774
        %v777 = vmul.f32 0.5, %v776
        %v778 = vsub.f32 1.5, %v777
        %v779 = vmul.f32 %v774, %v778
        %vm780 = vweird.f32 %v773
        %vm781 = vweird.f32 %v774
        %vm782 = vmor %vm780, %vm781
        %v783 = vsel %vm782, %v774, %v779
        %v784 = vmul.f32 %v737, %v783
        %v785 = vmul.f32 %v784, %v765
        %v786 = vpack.c.bf16 %v767, %v767
        %v787 = vpack.c.bf16 %v785, %v785
        %v788 = vld [vmem:[%s4] sm:$0xf]
        %v789 = vld [vmem:[%s4 + $0x4] sm:$0xf]
        %v790 = vld [vmem:[%s4 + $0x8] sm:$0xf]
        %v791 = vld [vmem:[%s4 + $0xc] sm:$0xf]
        %v796 = vunpack.c.l.b16 %v788
        %v797 = vunpack.c.l.b16 %v789
        %v798 = vunpack.c.l.b16 %v790
        %v799 = vunpack.c.l.b16 %v791
        %v800 = vpack.c.b16 %v797, %v796
        %v801 = vpack.c.b16 %v799, %v798
        %v805 = vsel %vm740, %v786, 0
        %807 = vmatpush.bf16.msra.mxu0 0
        %808 = vmatpush.bf16.msra.mxu0 0
        %809 = vmatpush.bf16.msra.mxu0 0
        %810 = vmatpush.bf16.msra.mxu0 0
        %811 = vmatpush.bf16.msra.mxu0 0
        %812 = vmatpush.bf16.msra.mxu0 0
        %813 = vmatpush.bf16.msra.mxu0 %v801
        %814 = vmatpush.bf16.msra.mxu0 %v800
        %815 = vmatmul.bf16.gmra.mxu0 %v805
        %v816 = vpop.f32.mrf.mxu0
        %v817 = vadd.f32 0.0, %v816
        %v818 = vpop.f32.mrf.mxu0
        %819 = vdwg.mxu0
        %v820 = vld [vmem:[%s703] sm:$0xff]
        %v821 = vld [vmem:[%s707] sm:$0xff]
        %v822 = vsub.f32 0.0, %v817
        %824 = vrot.lane.b32.xlu0 %v822, 112
        %v825 = vpop.permute.xlu0 %824
        %828 = vrot.lane.b32.xlu0 %v817, 16
        %v829 = vpop.permute.xlu0 %828
        %vm831 = vcmask 130048
        %v832 = vsel %vm831, %v825, %v829
        %v833 = vmul.f32 %v817, %v820
        %v834 = vmul.f32 %v832, %v821
        %v835 = vadd.f32 %v833, %v834
        %v837 = vsel %vm740, %v787, 0
        %839 = vmatpush.bf16.msra.mxu0 0
        %840 = vmatpush.bf16.msra.mxu0 0
        %841 = vmatpush.bf16.msra.mxu0 0
        %842 = vmatpush.bf16.msra.mxu0 0
        %843 = vmatpush.bf16.msra.mxu0 0
        %844 = vmatpush.bf16.msra.mxu0 0
        %845 = vmatpush.bf16.msra.mxu0 %v801
        %846 = vmatpush.bf16.msra.mxu0 %v800
        %847 = vmatmul.bf16.gmra.mxu0 %v837
        %v848 = vpop.f32.mrf.mxu0
        %v849 = vadd.f32 0.0, %v848
        %v850 = vpop.f32.mrf.mxu0
        %851 = vdwg.mxu0
        %v852 = vld [vmem:[%s714] sm:$0xff]
        %v853 = vld [vmem:[%s724] sm:$0xff]
        %v854 = vsub.f32 0.0, %v849
        %856 = vrot.lane.b32.xlu0 %v854, 112
        %v857 = vpop.permute.xlu0 %856
        %860 = vrot.lane.b32.xlu0 %v849, 16
        %v861 = vpop.permute.xlu0 %860
        %v863 = vsel %vm831, %v857, %v861
        %v864 = vmul.f32 %v849, %v852
        %v865 = vmul.f32 %v863, %v853
        %v866 = vadd.f32 %v864, %v865
        %v867 = vpack.c.bf16 %v835, %v866
        %v868 = vlaneseq
        %v869 = vshrl.u32 %v868, 7
        %s870 = smul.u32 %s35, 8
        %v871 = vstv %s870
        %v872 = vadd.s32 %v869, %v871
        %v873 = vlaneseq
        %v874 = vand.u32 %v873, 127
        %s875 = ssub.s32 %s35, 1
        %s876 = smul.u32 %s875, 8
        %v877 = vstv %s876
        %v878 = vadd.s32 %v874, %v877
        %vm879 = vcmp.ge.s32.totalorder %v878, 0
        %vm880 = vcmp.le.s32.totalorder %v878, %v872
        %vm881 = vmand %vm879, %vm880
        %v882 = vsub.s32 %v872, %v878
        %vm883 = vcmp.le.s32.totalorder %v882, 4
        %vm884 = vmand %vm881, %vm883
        %v885 = vld [vmem:[%s734] sm:$0x1]
        %vm886 = vcmp.lt.f32.partialorder %v885, 0.5
        %v887 = vsel %vm886, 1, 0
        %v888 = vperm.slane %v887, 0
        %vm889 = vcmp.eq.s32.totalorder %v888, 1
        %vm890 = vmand %vm884, %vm889
        %v891 = vld [vmem:[%s5] sm:$0xf]
        %v892 = vld [vmem:[%s5 + $0x4] sm:$0xf]
        %v893 = vld [vmem:[%s5 + $0x8] sm:$0xf]
        %v894 = vld [vmem:[%s5 + $0xc] sm:$0xf]
        %v899 = vunpack.c.l.b16 %v891
        %v900 = vunpack.c.l.b16 %v892
        %v901 = vunpack.c.l.b16 %v893
        %v902 = vunpack.c.l.b16 %v894
        %v903 = vpack.c.b16 %v900, %v899
        %v904 = vpack.c.b16 %v902, %v901
        %907 = vmatpush.bf16.msra.mxu0 0
        %908 = vmatpush.bf16.msra.mxu0 0
        %909 = vmatpush.bf16.msra.mxu0 0
        %910 = vmatpush.bf16.msra.mxu0 0
        %911 = vmatpush.bf16.msra.mxu0 0
        %912 = vmatpush.bf16.msra.mxu0 0
        %913 = vmatpush.bf16.msra.mxu0 %v904
        %914 = vmatpush.bf16.msra.mxu0 %v903
        %915 = vmatmul.bf16.gmra.mxu0 %v805
        %v916 = vpop.f32.mrf.mxu0
        %v917 = vadd.f32 0.0, %v916
        %v918 = vpop.f32.mrf.mxu0
        %919 = vdwg.mxu0
        %v920 = vld [vmem:[%s6] sm:$0xf]
        %v921 = vld [vmem:[%s6 + $0x4] sm:$0xf]
        %v922 = vld [vmem:[%s6 + $0x8] sm:$0xf]
        %v923 = vld [vmem:[%s6 + $0xc] sm:$0xf]
        %v928 = vunpack.c.l.b16 %v920
        %v929 = vunpack.c.l.b16 %v921
        %v930 = vunpack.c.l.b16 %v922
        %v931 = vunpack.c.l.b16 %v923
        %v932 = vpack.c.b16 %v929, %v928
        %v933 = vpack.c.b16 %v931, %v930
        %v937 = vsel %vm740, %v867, 0
        %939 = vmatpush.bf16.msra.mxu0 0
        %940 = vmatpush.bf16.msra.mxu0 0
        %941 = vmatpush.bf16.msra.mxu0 0
        %942 = vmatpush.bf16.msra.mxu0 0
        %943 = vmatpush.bf16.msra.mxu0 0
        %944 = vmatpush.bf16.msra.mxu0 0
        %945 = vmatpush.bf16.msra.mxu0 %v933
        %946 = vmatpush.bf16.msra.mxu0 %v932
        %947 = vmatmul.bf16.gmra.mxu0 %v937
        %v948 = vpop.f32.mrf.mxu0
        %v949 = vadd.f32 0.0, %v948
        %v950 = vpop.f32.mrf.mxu0
        %v951 = vadd.f32 0.0, %v950
        %952 = vdwg.mxu0
        %v953 = vpack.c.bf16 %v917, %v917
        %v954 = vpack.c.bf16 %v951, %v949
        %v956 = vsel %vm831, %v953, 0
        %v959 = vsel %vm831, %v954, 0
        %961 = vmatpush.bf16.xpose.msra.mxu0 0
        %962 = vmatpush.bf16.xpose.msra.mxu0 0
        %963 = vmatpush.bf16.xpose.msra.mxu0 0
        %964 = vmatpush.bf16.xpose.msra.mxu0 0
        %965 = vmatpush.bf16.xpose.msra.mxu0 0
        %966 = vmatpush.bf16.xpose.msra.mxu0 0
        %967 = vmatpush.bf16.xpose.msra.mxu0 0
        %968 = vmatpush.bf16.xpose.msra.mxu0 %v959
        %969 = vmatmul.bf16.gmra.mxu0 %v956
        %v970 = vpop.f32.mrf.mxu0
        %v971 = vadd.f32 0.0, %v970
        %v972 = vpop.f32.mrf.mxu0
        %973 = vdwg.mxu0
        %v974 = vsel %vm890, %v971, -1e+30
        %v975 = vsel %vm831, %v974, -inf
        %976 = vmax.xlane.f32.xlu0 %v975
        %v977 = vpop.xlane.xlu0 %976
        %v978 = vsub.f32 %v974, %v977
        %v979 = vmul.f32 %v978, 1.442695
        %v980 = vpow.pop %v979
        %v981 = vsel %vm831, %v980, 0.0
        %982 = vadd.xlane.f32.xlu0 %v981
        %v983 = vpop.xlane.xlu0 %982
        %v984 = vrcp.pop %v983
        %v985 = vmul.f32 %v983, %v984
        %v986 = vsub.f32 1.0, %v985
        %v987 = vmul.f32 %v984, %v986
        %v988 = vadd.f32 %v984, %v987
        %vm989 = vweird.f32 %v983
        %vm990 = vweird.f32 %v984
        %vm991 = vmor %vm989, %vm990
        %v992 = vsel %vm991, %v984, %v988
        %v993 = vand.u32 2147483647, %v983
        %vm994 = vcmp.eq.f32.partialorder %v993, 8.507059e+37
        %v995 = vand.u32 %v983, 2147483648
        %v996 = vor.u32 1.1754944e-38, %v995
        %v997 = vsel %vm994, %v996, %v992
        %v998 = vmul.f32 %v980, %v997
        %v999 = vpack.c.bf16 %v998, %v998
        %v1001 = vsel %vm831, %v999, 0
        %1003 = vmatpush.bf16.msra.mxu0 0
        %1004 = vmatpush.bf16.msra.mxu0 0
        %1005 = vmatpush.bf16.msra.mxu0 0
        %1006 = vmatpush.bf16.msra.mxu0 0
        %1007 = vmatpush.bf16.msra.mxu0 0
        %1008 = vmatpush.bf16.msra.mxu0 0
        %1009 = vmatpush.bf16.msra.mxu0 0
        %1010 = vmatpush.bf16.msra.mxu0 %v867
        %1011 = vmatmul.bf16.gmra.mxu0 %v1001
        %v1012 = vpop.f32.mrf.mxu0
        %v1013 = vadd.f32 0.0, %v1012
        %v1014 = vpop.f32.mrf.mxu0
        %1015 = vdwg.mxu0
        %v1016 = vpack.c.bf16 %v1013, %v1013
        %v1017 = vld [vmem:[%s7] sm:$0xf]
        %v1018 = vld [vmem:[%s7 + $0x4] sm:$0xf]
        %v1019 = vld [vmem:[%s7 + $0x8] sm:$0xf]
        %v1020 = vld [vmem:[%s7 + $0xc] sm:$0xf]
        %s1021 = scalar_lea.vmem %s5, 16
        %v1022 = vld [vmem:[%s1021] sm:$0xf]
        %v1023 = vld [vmem:[%s1021 + $0x4] sm:$0xf]
        %v1024 = vld [vmem:[%s1021 + $0x8] sm:$0xf]
        %v1025 = vld [vmem:[%s1021 + $0xc] sm:$0xf]
        %v1030 = vunpack.c.l.b16 %v1022
        %v1031 = vunpack.c.l.b16 %v1023
        %v1032 = vunpack.c.l.b16 %v1024
        %v1033 = vunpack.c.l.b16 %v1025
        %v1034 = vpack.c.b16 %v1031, %v1030
        %v1035 = vpack.c.b16 %v1033, %v1032
        %1038 = vmatpush.bf16.msra.mxu0 0
        %1039 = vmatpush.bf16.msra.mxu0 0
        %1040 = vmatpush.bf16.msra.mxu0 0
        %1041 = vmatpush.bf16.msra.mxu0 0
        %1042 = vmatpush.bf16.msra.mxu0 0
        %1043 = vmatpush.bf16.msra.mxu0 0
        %1044 = vmatpush.bf16.msra.mxu0 %v1035
        %1045 = vmatpush.bf16.msra.mxu0 %v1034
        %1046 = vmatmul.bf16.gmra.mxu0 %v805
        %v1047 = vpop.f32.mrf.mxu0
        %v1048 = vadd.f32 0.0, %v1047
        %v1049 = vpop.f32.mrf.mxu0
        %1050 = vdwg.mxu0
        %s1051 = scalar_lea.vmem %s6, 16
        %v1052 = vld [vmem:[%s1051] sm:$0xf]
        %v1053 = vld [vmem:[%s1051 + $0x4] sm:$0xf]
        %v1054 = vld [vmem:[%s1051 + $0x8] sm:$0xf]
        %v1055 = vld [vmem:[%s1051 + $0xc] sm:$0xf]
        %v1060 = vunpack.c.l.b16 %v1052
        %v1061 = vunpack.c.l.b16 %v1053
        %v1062 = vunpack.c.l.b16 %v1054
        %v1063 = vunpack.c.l.b16 %v1055
        %v1064 = vpack.c.b16 %v1061, %v1060
        %v1065 = vpack.c.b16 %v1063, %v1062
        %1068 = vmatpush.bf16.msra.mxu0 0
        %1069 = vmatpush.bf16.msra.mxu0 0
        %1070 = vmatpush.bf16.msra.mxu0 0
        %1071 = vmatpush.bf16.msra.mxu0 0
        %1072 = vmatpush.bf16.msra.mxu0 0
        %1073 = vmatpush.bf16.msra.mxu0 0
        %1074 = vmatpush.bf16.msra.mxu0 %v1065
        %1075 = vmatpush.bf16.msra.mxu0 %v1064
        %1076 = vmatmul.bf16.gmra.mxu0 %v937
        %v1077 = vpop.f32.mrf.mxu0
        %v1078 = vadd.f32 0.0, %v1077
        %v1079 = vpop.f32.mrf.mxu0
        %v1080 = vadd.f32 0.0, %v1079
        %1081 = vdwg.mxu0
        %v1082 = vpack.c.bf16 %v1048, %v1048
        %v1083 = vpack.c.bf16 %v1080, %v1078
        %v1085 = vsel %vm831, %v1082, 0
        %v1088 = vsel %vm831, %v1083, 0
        %1090 = vmatpush.bf16.xpose.msra.mxu0 0
        %1091 = vmatpush.bf16.xpose.msra.mxu0 0
        %1092 = vmatpush.bf16.xpose.msra.mxu0 0
        %1093 = vmatpush.bf16.xpose.msra.mxu0 0
        %1094 = vmatpush.bf16.xpose.msra.mxu0 0
        %1095 = vmatpush.bf16.xpose.msra.mxu0 0
        %1096 = vmatpush.bf16.xpose.msra.mxu0 0
        %1097 = vmatpush.bf16.xpose.msra.mxu0 %v1088
        %1098 = vmatmul.bf16.gmra.mxu0 %v1085
        %v1099 = vpop.f32.mrf.mxu0
        %v1100 = vadd.f32 0.0, %v1099
        %v1101 = vpop.f32.mrf.mxu0
        %1102 = vdwg.mxu0
        %v1103 = vsel %vm890, %v1100, -1e+30
        %v1104 = vsel %vm831, %v1103, -inf
        %1105 = vmax.xlane.f32.xlu0 %v1104
        %v1106 = vpop.xlane.xlu0 %1105
        %v1107 = vsub.f32 %v1103, %v1106
        %v1108 = vmul.f32 %v1107, 1.442695
        %v1109 = vpow.pop %v1108
        %v1110 = vsel %vm831, %v1109, 0.0
        %1111 = vadd.xlane.f32.xlu0 %v1110
        %v1112 = vpop.xlane.xlu0 %1111
        %v1113 = vrcp.pop %v1112
        %v1114 = vmul.f32 %v1112, %v1113
        %v1115 = vsub.f32 1.0, %v1114
        %v1116 = vmul.f32 %v1113, %v1115
        %v1117 = vadd.f32 %v1113, %v1116
        %vm1118 = vweird.f32 %v1112
        %vm1119 = vweird.f32 %v1113
        %vm1120 = vmor %vm1118, %vm1119
        %v1121 = vsel %vm1120, %v1113, %v1117
        %v1122 = vand.u32 2147483647, %v1112
        %vm1123 = vcmp.eq.f32.partialorder %v1122, 8.507059e+37
        %v1124 = vand.u32 %v1112, 2147483648
        %v1125 = vor.u32 1.1754944e-38, %v1124
        %v1126 = vsel %vm1123, %v1125, %v1121
        %v1127 = vmul.f32 %v1109, %v1126
        %v1128 = vpack.c.bf16 %v1127, %v1127
        %v1130 = vsel %vm831, %v1128, 0
        %1132 = vmatpush.bf16.msra.mxu0 0
        %1133 = vmatpush.bf16.msra.mxu0 0
        %1134 = vmatpush.bf16.msra.mxu0 0
        %1135 = vmatpush.bf16.msra.mxu0 0
        %1136 = vmatpush.bf16.msra.mxu0 0
        %1137 = vmatpush.bf16.msra.mxu0 0
        %1138 = vmatpush.bf16.msra.mxu0 0
        %1139 = vmatpush.bf16.msra.mxu0 %v867
        %1140 = vmatmul.bf16.gmra.mxu0 %v1130
        %v1141 = vpop.f32.mrf.mxu0
        %v1142 = vadd.f32 0.0, %v1141
        %v1143 = vpop.f32.mrf.mxu0
        %1144 = vdwg.mxu0
        %v1145 = vpack.c.bf16 %v1142, %v1142
        %s1146 = scalar_lea.vmem %s7, 16
        %v1147 = vld [vmem:[%s1146] sm:$0xf]
        %v1148 = vld [vmem:[%s1146 + $0x4] sm:$0xf]
        %v1149 = vld [vmem:[%s1146 + $0x8] sm:$0xf]
        %v1150 = vld [vmem:[%s1146 + $0xc] sm:$0xf]
        %v1155 = vunpack.c.l.b16 %v1147
        %v1156 = vunpack.c.l.b16 %v1148
        %v1157 = vunpack.c.l.b16 %v1149
        %v1158 = vunpack.c.l.b16 %v1150
        %v1159 = vpack.c.b16 %v1156, %v1155
        %v1160 = vpack.c.b16 %v1158, %v1157
        %v1164 = vsel %vm740, %v1145, 0
        %1166 = vmatpush.bf16.msra.mxu0 0
        %1167 = vmatpush.bf16.msra.mxu0 0
        %1168 = vmatpush.bf16.msra.mxu0 0
        %1169 = vmatpush.bf16.msra.mxu0 0
        %1170 = vmatpush.bf16.msra.mxu0 0
        %1171 = vmatpush.bf16.msra.mxu0 0
        %1172 = vmatpush.bf16.msra.mxu0 %v1160
        %1173 = vmatpush.bf16.msra.mxu0 %v1159
        %1174 = vmatmul.bf16.gmra.mxu0 %v1164
        %v1175 = vpop.f32.mrf.mxu0
        %v1176 = vadd.f32 0.0, %v1175
        %v1177 = vpop.f32.mrf.mxu0
        %1178 = vdwg.mxu0
        %v1183 = vunpack.c.l.b16 %v1017
        %v1184 = vunpack.c.l.b16 %v1018
        %v1185 = vunpack.c.l.b16 %v1019
        %v1186 = vunpack.c.l.b16 %v1020
        %v1187 = vpack.c.b16 %v1184, %v1183
        %v1188 = vpack.c.b16 %v1186, %v1185
        %v1192 = vsel %vm740, %v1016, 0
        %1194 = vmatpush.bf16.msra.mxu0 0
        %1195 = vmatpush.bf16.msra.mxu0 0
        %1196 = vmatpush.bf16.msra.mxu0 0
        %1197 = vmatpush.bf16.msra.mxu0 0
        %1198 = vmatpush.bf16.msra.mxu0 0
        %1199 = vmatpush.bf16.msra.mxu0 0
        %1200 = vmatpush.bf16.msra.mxu0 %v1188
        %1201 = vmatpush.bf16.msra.mxu0 %v1187
        %1202 = vmatmul.bf16.gmra.mxu0 %v1192
        %v1203 = vpop.f32.mrf.mxu0
        %v1204 = vadd.f32 %v1176, %v1203
        %v1205 = vpop.f32.mrf.mxu0
        %1206 = vdwg.mxu0
        %s1207 = scalar_lea.vmem %s5, 32
        %v1208 = vld [vmem:[%s1207] sm:$0xf]
        %v1209 = vld [vmem:[%s1207 + $0x4] sm:$0xf]
        %v1210 = vld [vmem:[%s1207 + $0x8] sm:$0xf]
        %v1211 = vld [vmem:[%s1207 + $0xc] sm:$0xf]
        %v1216 = vunpack.c.l.b16 %v1208
        %v1217 = vunpack.c.l.b16 %v1209
        %v1218 = vunpack.c.l.b16 %v1210
        %v1219 = vunpack.c.l.b16 %v1211
        %v1220 = vpack.c.b16 %v1217, %v1216
        %v1221 = vpack.c.b16 %v1219, %v1218
        %1224 = vmatpush.bf16.msra.mxu0 0
        %1225 = vmatpush.bf16.msra.mxu0 0
        %1226 = vmatpush.bf16.msra.mxu0 0
        %1227 = vmatpush.bf16.msra.mxu0 0
        %1228 = vmatpush.bf16.msra.mxu0 0
        %1229 = vmatpush.bf16.msra.mxu0 0
        %1230 = vmatpush.bf16.msra.mxu0 %v1221
        %1231 = vmatpush.bf16.msra.mxu0 %v1220
        %1232 = vmatmul.bf16.gmra.mxu0 %v805
        %v1233 = vpop.f32.mrf.mxu0
        %v1234 = vadd.f32 0.0, %v1233
        %v1235 = vpop.f32.mrf.mxu0
        %1236 = vdwg.mxu0
        %s1237 = scalar_lea.vmem %s6, 32
        %v1238 = vld [vmem:[%s1237] sm:$0xf]
        %v1239 = vld [vmem:[%s1237 + $0x4] sm:$0xf]
        %v1240 = vld [vmem:[%s1237 + $0x8] sm:$0xf]
        %v1241 = vld [vmem:[%s1237 + $0xc] sm:$0xf]
        %v1246 = vunpack.c.l.b16 %v1238
        %v1247 = vunpack.c.l.b16 %v1239
        %v1248 = vunpack.c.l.b16 %v1240
        %v1249 = vunpack.c.l.b16 %v1241
        %v1250 = vpack.c.b16 %v1247, %v1246
        %v1251 = vpack.c.b16 %v1249, %v1248
        %1254 = vmatpush.bf16.msra.mxu0 0
        %1255 = vmatpush.bf16.msra.mxu0 0
        %1256 = vmatpush.bf16.msra.mxu0 0
        %1257 = vmatpush.bf16.msra.mxu0 0
        %1258 = vmatpush.bf16.msra.mxu0 0
        %1259 = vmatpush.bf16.msra.mxu0 0
        %1260 = vmatpush.bf16.msra.mxu0 %v1251
        %1261 = vmatpush.bf16.msra.mxu0 %v1250
        %1262 = vmatmul.bf16.gmra.mxu0 %v937
        %v1263 = vpop.f32.mrf.mxu0
        %v1264 = vadd.f32 0.0, %v1263
        %v1265 = vpop.f32.mrf.mxu0
        %v1266 = vadd.f32 0.0, %v1265
        %1267 = vdwg.mxu0
        %v1268 = vpack.c.bf16 %v1234, %v1234
        %v1269 = vpack.c.bf16 %v1266, %v1264
        %v1271 = vsel %vm831, %v1268, 0
        %v1274 = vsel %vm831, %v1269, 0
        %1276 = vmatpush.bf16.xpose.msra.mxu0 0
        %1277 = vmatpush.bf16.xpose.msra.mxu0 0
        %1278 = vmatpush.bf16.xpose.msra.mxu0 0
        %1279 = vmatpush.bf16.xpose.msra.mxu0 0
        %1280 = vmatpush.bf16.xpose.msra.mxu0 0
        %1281 = vmatpush.bf16.xpose.msra.mxu0 0
        %1282 = vmatpush.bf16.xpose.msra.mxu0 0
        %1283 = vmatpush.bf16.xpose.msra.mxu0 %v1274
        %1284 = vmatmul.bf16.gmra.mxu0 %v1271
        %v1285 = vpop.f32.mrf.mxu0
        %v1286 = vadd.f32 0.0, %v1285
        %v1287 = vpop.f32.mrf.mxu0
        %1288 = vdwg.mxu0
        %v1289 = vsel %vm890, %v1286, -1e+30
        %v1290 = vsel %vm831, %v1289, -inf
        %1291 = vmax.xlane.f32.xlu0 %v1290
        %v1292 = vpop.xlane.xlu0 %1291
        %v1293 = vsub.f32 %v1289, %v1292
        %v1294 = vmul.f32 %v1293, 1.442695
        %v1295 = vpow.pop %v1294
        %v1296 = vsel %vm831, %v1295, 0.0
        %1297 = vadd.xlane.f32.xlu0 %v1296
        %v1298 = vpop.xlane.xlu0 %1297
        %v1299 = vrcp.pop %v1298
        %v1300 = vmul.f32 %v1298, %v1299
        %v1301 = vsub.f32 1.0, %v1300
        %v1302 = vmul.f32 %v1299, %v1301
        %v1303 = vadd.f32 %v1299, %v1302
        %vm1304 = vweird.f32 %v1298
        %vm1305 = vweird.f32 %v1299
        %vm1306 = vmor %vm1304, %vm1305
        %v1307 = vsel %vm1306, %v1299, %v1303
        %v1308 = vand.u32 2147483647, %v1298
        %vm1309 = vcmp.eq.f32.partialorder %v1308, 8.507059e+37
        %v1310 = vand.u32 %v1298, 2147483648
        %v1311 = vor.u32 1.1754944e-38, %v1310
        %v1312 = vsel %vm1309, %v1311, %v1307
        %v1313 = vmul.f32 %v1295, %v1312
        %v1314 = vpack.c.bf16 %v1313, %v1313
        %v1316 = vsel %vm831, %v1314, 0
        %1318 = vmatpush.bf16.msra.mxu0 0
        %1319 = vmatpush.bf16.msra.mxu0 0
        %1320 = vmatpush.bf16.msra.mxu0 0
        %1321 = vmatpush.bf16.msra.mxu0 0
        %1322 = vmatpush.bf16.msra.mxu0 0
        %1323 = vmatpush.bf16.msra.mxu0 0
        %1324 = vmatpush.bf16.msra.mxu0 0
        %1325 = vmatpush.bf16.msra.mxu0 %v867
        %1326 = vmatmul.bf16.gmra.mxu0 %v1316
        %v1327 = vpop.f32.mrf.mxu0
        %v1328 = vadd.f32 0.0, %v1327
        %v1329 = vpop.f32.mrf.mxu0
        %1330 = vdwg.mxu0
        %v1331 = vpack.c.bf16 %v1328, %v1328
        %s1332 = scalar_lea.vmem %s7, 32
        %v1333 = vld [vmem:[%s1332] sm:$0xf]
        %v1334 = vld [vmem:[%s1332 + $0x4] sm:$0xf]
        %v1335 = vld [vmem:[%s1332 + $0x8] sm:$0xf]
        %v1336 = vld [vmem:[%s1332 + $0xc] sm:$0xf]
        %v1341 = vunpack.c.l.b16 %v1333
        %v1342 = vunpack.c.l.b16 %v1334
        %v1343 = vunpack.c.l.b16 %v1335
        %v1344 = vunpack.c.l.b16 %v1336
        %v1345 = vpack.c.b16 %v1342, %v1341
        %v1346 = vpack.c.b16 %v1344, %v1343
        %v1350 = vsel %vm740, %v1331, 0
        %1352 = vmatpush.bf16.msra.mxu0 0
        %1353 = vmatpush.bf16.msra.mxu0 0
        %1354 = vmatpush.bf16.msra.mxu0 0
        %1355 = vmatpush.bf16.msra.mxu0 0
        %1356 = vmatpush.bf16.msra.mxu0 0
        %1357 = vmatpush.bf16.msra.mxu0 0
        %1358 = vmatpush.bf16.msra.mxu0 %v1346
        %1359 = vmatpush.bf16.msra.mxu0 %v1345
        %1360 = vmatmul.bf16.gmra.mxu0 %v1350
        %v1361 = vpop.f32.mrf.mxu0
        %v1362 = vadd.f32 0.0, %v1361
        %v1363 = vpop.f32.mrf.mxu0
        %1364 = vdwg.mxu0
        %v1365 = vadd.f32 %v1204, %v1362
        %s1366 = scalar_lea.vmem %s5, 48
        %v1367 = vld [vmem:[%s1366] sm:$0xf]
        %v1368 = vld [vmem:[%s1366 + $0x4] sm:$0xf]
        %v1369 = vld [vmem:[%s1366 + $0x8] sm:$0xf]
        %v1370 = vld [vmem:[%s1366 + $0xc] sm:$0xf]
        %v1375 = vunpack.c.l.b16 %v1367
        %v1376 = vunpack.c.l.b16 %v1368
        %v1377 = vunpack.c.l.b16 %v1369
        %v1378 = vunpack.c.l.b16 %v1370
        %v1379 = vpack.c.b16 %v1376, %v1375
        %v1380 = vpack.c.b16 %v1378, %v1377
        %1383 = vmatpush.bf16.msra.mxu0 0
        %1384 = vmatpush.bf16.msra.mxu0 0
        %1385 = vmatpush.bf16.msra.mxu0 0
        %1386 = vmatpush.bf16.msra.mxu0 0
        %1387 = vmatpush.bf16.msra.mxu0 0
        %1388 = vmatpush.bf16.msra.mxu0 0
        %1389 = vmatpush.bf16.msra.mxu0 %v1380
        %1390 = vmatpush.bf16.msra.mxu0 %v1379
        %1391 = vmatmul.bf16.gmra.mxu0 %v805
        %v1392 = vpop.f32.mrf.mxu0
        %v1393 = vadd.f32 0.0, %v1392
        %v1394 = vpop.f32.mrf.mxu0
        %1395 = vdwg.mxu0
        %s1396 = scalar_lea.vmem %s6, 48
        %v1397 = vld [vmem:[%s1396] sm:$0xf]
        %v1398 = vld [vmem:[%s1396 + $0x4] sm:$0xf]
        %v1399 = vld [vmem:[%s1396 + $0x8] sm:$0xf]
        %v1400 = vld [vmem:[%s1396 + $0xc] sm:$0xf]
        %v1405 = vunpack.c.l.b16 %v1397
        %v1406 = vunpack.c.l.b16 %v1398
        %v1407 = vunpack.c.l.b16 %v1399
        %v1408 = vunpack.c.l.b16 %v1400
        %v1409 = vpack.c.b16 %v1406, %v1405
        %v1410 = vpack.c.b16 %v1408, %v1407
        %1413 = vmatpush.bf16.msra.mxu0 0
        %1414 = vmatpush.bf16.msra.mxu0 0
        %1415 = vmatpush.bf16.msra.mxu0 0
        %1416 = vmatpush.bf16.msra.mxu0 0
        %1417 = vmatpush.bf16.msra.mxu0 0
        %1418 = vmatpush.bf16.msra.mxu0 0
        %1419 = vmatpush.bf16.msra.mxu0 %v1410
        %1420 = vmatpush.bf16.msra.mxu0 %v1409
        %1421 = vmatmul.bf16.gmra.mxu0 %v937
        %v1422 = vpop.f32.mrf.mxu0
        %v1423 = vadd.f32 0.0, %v1422
        %v1424 = vpop.f32.mrf.mxu0
        %v1425 = vadd.f32 0.0, %v1424
        %1426 = vdwg.mxu0
        %v1427 = vpack.c.bf16 %v1393, %v1393
        %v1428 = vpack.c.bf16 %v1425, %v1423
        %v1430 = vsel %vm831, %v1427, 0
        %v1433 = vsel %vm831, %v1428, 0
        %1435 = vmatpush.bf16.xpose.msra.mxu0 0
        %1436 = vmatpush.bf16.xpose.msra.mxu0 0
        %1437 = vmatpush.bf16.xpose.msra.mxu0 0
        %1438 = vmatpush.bf16.xpose.msra.mxu0 0
        %1439 = vmatpush.bf16.xpose.msra.mxu0 0
        %1440 = vmatpush.bf16.xpose.msra.mxu0 0
        %1441 = vmatpush.bf16.xpose.msra.mxu0 0
        %1442 = vmatpush.bf16.xpose.msra.mxu0 %v1433
        %1443 = vmatmul.bf16.gmra.mxu0 %v1430
        %v1444 = vpop.f32.mrf.mxu0
        %v1445 = vadd.f32 0.0, %v1444
        %v1446 = vpop.f32.mrf.mxu0
        %1447 = vdwg.mxu0
        %v1448 = vsel %vm890, %v1445, -1e+30
        %v1449 = vsel %vm831, %v1448, -inf
        %1450 = vmax.xlane.f32.xlu0 %v1449
        %v1451 = vpop.xlane.xlu0 %1450
        %v1452 = vsub.f32 %v1448, %v1451
        %v1453 = vmul.f32 %v1452, 1.442695
        %v1454 = vpow.pop %v1453
        %v1455 = vsel %vm831, %v1454, 0.0
        %1456 = vadd.xlane.f32.xlu0 %v1455
        %v1457 = vpop.xlane.xlu0 %1456
        %v1458 = vrcp.pop %v1457
        %v1459 = vmul.f32 %v1457, %v1458
        %v1460 = vsub.f32 1.0, %v1459
        %v1461 = vmul.f32 %v1458, %v1460
        %v1462 = vadd.f32 %v1458, %v1461
        %vm1463 = vweird.f32 %v1457
        %vm1464 = vweird.f32 %v1458
        %vm1465 = vmor %vm1463, %vm1464
        %v1466 = vsel %vm1465, %v1458, %v1462
        %v1467 = vand.u32 2147483647, %v1457
        %vm1468 = vcmp.eq.f32.partialorder %v1467, 8.507059e+37
        %v1469 = vand.u32 %v1457, 2147483648
        %v1470 = vor.u32 1.1754944e-38, %v1469
        %v1471 = vsel %vm1468, %v1470, %v1466
        %v1472 = vmul.f32 %v1454, %v1471
        %v1473 = vpack.c.bf16 %v1472, %v1472
        %v1475 = vsel %vm831, %v1473, 0
        %1477 = vmatpush.bf16.msra.mxu0 0
        %1478 = vmatpush.bf16.msra.mxu0 0
        %1479 = vmatpush.bf16.msra.mxu0 0
        %1480 = vmatpush.bf16.msra.mxu0 0
        %1481 = vmatpush.bf16.msra.mxu0 0
        %1482 = vmatpush.bf16.msra.mxu0 0
        %1483 = vmatpush.bf16.msra.mxu0 0
        %1484 = vmatpush.bf16.msra.mxu0 %v867
        %1485 = vmatmul.bf16.gmra.mxu0 %v1475
        %v1486 = vpop.f32.mrf.mxu0
        %v1487 = vadd.f32 0.0, %v1486
        %v1488 = vpop.f32.mrf.mxu0
        %1489 = vdwg.mxu0
        %v1490 = vpack.c.bf16 %v1487, %v1487
        %s1491 = scalar_lea.vmem %s7, 48
        %v1492 = vld [vmem:[%s1491] sm:$0xf]
        %v1493 = vld [vmem:[%s1491 + $0x4] sm:$0xf]
        %v1494 = vld [vmem:[%s1491 + $0x8] sm:$0xf]
        %v1495 = vld [vmem:[%s1491 + $0xc] sm:$0xf]
        %v1500 = vunpack.c.l.b16 %v1492
        %v1501 = vunpack.c.l.b16 %v1493
        %v1502 = vunpack.c.l.b16 %v1494
        %v1503 = vunpack.c.l.b16 %v1495
        %v1504 = vpack.c.b16 %v1501, %v1500
        %v1505 = vpack.c.b16 %v1503, %v1502
        %v1509 = vsel %vm740, %v1490, 0
        %1511 = vmatpush.bf16.msra.mxu0 0
        %1512 = vmatpush.bf16.msra.mxu0 0
        %1513 = vmatpush.bf16.msra.mxu0 0
        %1514 = vmatpush.bf16.msra.mxu0 0
        %1515 = vmatpush.bf16.msra.mxu0 0
        %1516 = vmatpush.bf16.msra.mxu0 0
        %1517 = vmatpush.bf16.msra.mxu0 %v1505
        %1518 = vmatpush.bf16.msra.mxu0 %v1504
        %1519 = vmatmul.bf16.gmra.mxu0 %v1509
        %v1520 = vpop.f32.mrf.mxu0
        %v1521 = vadd.f32 0.0, %v1520
        %v1522 = vpop.f32.mrf.mxu0
        %1523 = vdwg.mxu0
        %v1524 = vadd.f32 %v1365, %v1521
        %v1525 = vadd.f32 %v736, %v1524
        %v1526 = vld [vmem:[%s3] sm:$0x1]
        %v1527 = vmul.f32 %v1525, %v1525
        %v1528 = vsel %vm740, %v1527, 0.0
        %1529 = vadd.xlane.f32.xlu0 %v1528
        %v1530 = vpop.xlane.xlu0 %1529
        %v1531 = vmul.f32 %v1530, %v750
        %v1532 = vadd.f32 %v1531, 1.1920929e-07
        %v1533 = vrsqrt.pop %v1532
        %v1534 = vmul.f32 %v1533, %v1532
        %v1535 = vmul.f32 %v1534, %v1533
        %v1536 = vmul.f32 0.5, %v1535
        %v1537 = vsub.f32 1.5, %v1536
        %v1538 = vmul.f32 %v1533, %v1537
        %vm1539 = vweird.f32 %v1532
        %vm1540 = vweird.f32 %v1533
        %vm1541 = vmor %vm1539, %vm1540
        %v1542 = vsel %vm1541, %v1533, %v1538
        %v1543 = vmul.f32 %v1525, %v1542
        %v1545 = vperm.slane %v1526, 0
        %v1547 = vmul.f32 %v1543, %v1545
        %v1548 = vpack.c.bf16 %v1547, %v1547
        %v1549 = vld [vmem:[%s13] sm:$0xf]
        %v1550 = vld [vmem:[%s13 + $0x4] sm:$0xf]
        %v1551 = vld [vmem:[%s13 + $0x8] sm:$0xf]
        %v1552 = vld [vmem:[%s13 + $0xc] sm:$0xf]
        %v1557 = vunpack.c.l.b16 %v1549
        %v1558 = vunpack.c.l.b16 %v1550
        %v1559 = vunpack.c.l.b16 %v1551
        %v1560 = vunpack.c.l.b16 %v1552
        %v1561 = vpack.c.b16 %v1558, %v1557
        %v1562 = vpack.c.b16 %v1560, %v1559
        %v1566 = vsel %vm740, %v1548, 0
        %1568 = vmatpush.bf16.msra.mxu0 0
        %1569 = vmatpush.bf16.msra.mxu0 0
        %1570 = vmatpush.bf16.msra.mxu0 0
        %1571 = vmatpush.bf16.msra.mxu0 0
        %1572 = vmatpush.bf16.msra.mxu0 0
        %1573 = vmatpush.bf16.msra.mxu0 0
        %1574 = vmatpush.bf16.msra.mxu0 %v1562
        %1575 = vmatpush.bf16.msra.mxu0 %v1561
        %1576 = vmatmul.bf16.gmra.mxu0 %v1566
        %v1577 = vpop.f32.mrf.mxu0
        %v1578 = vadd.f32 0.0, %v1577
        %v1579 = vpop.f32.mrf.mxu0
        %1580 = vdwg.mxu0
        %v1581 = vld [vmem:[%s14] sm:$0xf]
        %v1582 = vld [vmem:[%s14 + $0x4] sm:$0xf]
        %v1583 = vld [vmem:[%s14 + $0x8] sm:$0xf]
        %v1584 = vld [vmem:[%s14 + $0xc] sm:$0xf]
        %v1589 = vunpack.c.l.b16 %v1581
        %v1590 = vunpack.c.l.b16 %v1582
        %v1591 = vunpack.c.l.b16 %v1583
        %v1592 = vunpack.c.l.b16 %v1584
        %v1593 = vpack.c.b16 %v1590, %v1589
        %v1594 = vpack.c.b16 %v1592, %v1591
        %1597 = vmatpush.bf16.msra.mxu0 0
        %1598 = vmatpush.bf16.msra.mxu0 0
        %1599 = vmatpush.bf16.msra.mxu0 0
        %1600 = vmatpush.bf16.msra.mxu0 0
        %1601 = vmatpush.bf16.msra.mxu0 0
        %1602 = vmatpush.bf16.msra.mxu0 0
        %1603 = vmatpush.bf16.msra.mxu0 %v1594
        %1604 = vmatpush.bf16.msra.mxu0 %v1593
        %1605 = vmatmul.bf16.gmra.mxu0 %v1566
        %v1606 = vpop.f32.mrf.mxu0
        %v1607 = vadd.f32 0.0, %v1606
        %v1608 = vpop.f32.mrf.mxu0
        %1609 = vdwg.mxu0
        %v1610 = vxor.u32 %v1578, 2147483648
        %v1611 = vmul.f32 %v1610, 1.442695
        %v1612 = vpow.pop %v1611
        %v1613 = vadd.f32 %v1612, 1.0
        %v1614 = vrcp.pop %v1613
        %v1615 = vmul.f32 %v1613, %v1614
        %v1616 = vsub.f32 1.0, %v1615
        %v1617 = vmul.f32 %v1614, %v1616
        %v1618 = vadd.f32 %v1614, %v1617
        %vm1619 = vweird.f32 %v1613
        %vm1620 = vweird.f32 %v1614
        %vm1621 = vmor %vm1619, %vm1620
        %v1622 = vsel %vm1621, %v1614, %v1618
        %v1623 = vand.u32 2147483647, %v1613
        %vm1624 = vcmp.eq.f32.partialorder %v1623, 8.507059e+37
        %v1625 = vand.u32 %v1613, 2147483648
        %v1626 = vor.u32 1.1754944e-38, %v1625
        %v1627 = vsel %vm1624, %v1626, %v1622
        %v1628 = vmul.f32 1.0, %v1627
        %v1629 = vmul.f32 %v1578, %v1628
        %v1630 = vmul.f32 %v1629, %v1607
        %v1631 = vpack.c.bf16 %v1630, %v1630
        %v1632 = vld [vmem:[%s15] sm:$0xf]
        %v1633 = vld [vmem:[%s15 + $0x4] sm:$0xf]
        %v1634 = vld [vmem:[%s15 + $0x8] sm:$0xf]
        %v1635 = vld [vmem:[%s15 + $0xc] sm:$0xf]
        %v1636 = vld [vmem:[%s15 + $0x10] sm:$0xf]
        %v1637 = vld [vmem:[%s15 + $0x14] sm:$0xf]
        %v1638 = vld [vmem:[%s15 + $0x18] sm:$0xf]
        %v1639 = vld [vmem:[%s15 + $0x1c] sm:$0xf]
        %v1640 = vld [vmem:[%s15 + $0x20] sm:$0xf]
        %v1641 = vld [vmem:[%s15 + $0x24] sm:$0xf]
        %v1642 = vld [vmem:[%s15 + $0x28] sm:$0xf]
        %v1643 = vld [vmem:[%s15 + $0x2c] sm:$0xf]
        %v1644 = vld [vmem:[%s15 + $0x30] sm:$0xf]
        %v1645 = vld [vmem:[%s15 + $0x34] sm:$0xf]
        %v1646 = vld [vmem:[%s15 + $0x38] sm:$0xf]
        %v1647 = vld [vmem:[%s15 + $0x3c] sm:$0xf]
        %v1664 = vunpack.c.l.b16 %v1632
        %v1665 = vunpack.c.l.b16 %v1633
        %v1666 = vunpack.c.l.b16 %v1634
        %v1667 = vunpack.c.l.b16 %v1635
        %v1668 = vunpack.c.l.b16 %v1636
        %v1669 = vunpack.c.l.b16 %v1637
        %v1670 = vunpack.c.l.b16 %v1638
        %v1671 = vunpack.c.l.b16 %v1639
        %v1672 = vunpack.c.l.b16 %v1640
        %v1673 = vunpack.c.l.b16 %v1641
        %v1674 = vunpack.c.l.b16 %v1642
        %v1675 = vunpack.c.l.b16 %v1643
        %v1676 = vunpack.c.l.b16 %v1644
        %v1677 = vunpack.c.l.b16 %v1645
        %v1678 = vunpack.c.l.b16 %v1646
        %v1679 = vunpack.c.l.b16 %v1647
        %v1680 = vpack.c.b16 %v1665, %v1664
        %v1681 = vpack.c.b16 %v1667, %v1666
        %v1682 = vpack.c.b16 %v1669, %v1668
        %v1683 = vpack.c.b16 %v1671, %v1670
        %v1684 = vpack.c.b16 %v1673, %v1672
        %v1685 = vpack.c.b16 %v1675, %v1674
        %v1686 = vpack.c.b16 %v1677, %v1676
        %v1687 = vpack.c.b16 %v1679, %v1678
        %1696 = vmatpush.bf16.msra.mxu0 %v1687
        %1697 = vmatpush.bf16.msra.mxu0 %v1686
        %1698 = vmatpush.bf16.msra.mxu0 %v1685
        %1699 = vmatpush.bf16.msra.mxu0 %v1684
        %1700 = vmatpush.bf16.msra.mxu0 %v1683
        %1701 = vmatpush.bf16.msra.mxu0 %v1682
        %1702 = vmatpush.bf16.msra.mxu0 %v1681
        %1703 = vmatpush.bf16.msra.mxu0 %v1680
        %1704 = vmatmul.bf16.gmra.mxu0 %v1631
        %v1705 = vpop.f32.mrf.mxu0
        %v1706 = vadd.f32 0.0, %v1705
        %v1707 = vpop.f32.mrf.mxu0
        %1708 = vdwg.mxu0
        %v1709 = vadd.f32 %v1525, %v1706
        %1710 = vst.msk [vmem:[%s677] sm:$0xff] %vm740, %v1709
        %s1711 = sand.u32 %s447, 1
        %s1712 = scalar_lea.sflag [#allocation3], %s1711
        %s1713 = sand.u32 %s447, 1
        %s1714 = smul.addr %s1713, 8
        %s1715 = scalar_lea.vmem [#allocation2], %s1714
        // Predicated region
        $region85: #{transformer_block.1} parent=83 // pred_check
          %p1716 = pneg %p457
        $region86: #{transformer_block.1} parent=83 // pred_check_branch
          %1718 = sbr.rel (%p1716) target = $region88
        $region87: #{transformer_block.1} parent=83 // pred_region
          %1720 = vsyncadd %s1712, 0
          %s1721 = smul.addr %s34, 2
          %s1722 = sadd.s32 %s35, %s1721
          %s1723 = smul.addr %s1722, 8
          %s1724 = scalar_lea.hbm %s16, %s1723
          %s1726 = sshll.u32 %s1715, 4
          %s1727 = int_to_ptr.vmem [resolvable:$true] %s1726
          %s1728 = sshll.u32 %s1724, 4
          %s1729 = int_to_ptr.hbm [resolvable:$true] %s1728
          %1731 = dma.vmem_to_hbm [thread:$0]  %s1727, 128, %s1729, %s1712
        $region88: #{transformer_block.1} parent=83 // pred_fallthru
          _
      $region84: #{transformer_block.1} parent=5 // pred_fallthru
        _
      %p1732 = scmp.le.s32.totalorder 2, %s25
      // Predicated region
      $region89: #{transformer_block.1} parent=5 // pred_check
        %p1733 = pneg %p1732
      $region90: #{transformer_block.1} parent=5 // pred_check_branch
        %1735 = sbr.rel (%p1733) target = $region92
      $region91: #{transformer_block.1} parent=5 // pred_region
        %s1736 = ssub.s32 %s25, 2
        // Predicated region
        $region93: #{transformer_block.1} parent=91 // pred_check
          %p1737 = pneg %p463
        $region94: #{transformer_block.1} parent=91 // pred_check_branch
          %1739 = sbr.rel (%p1737) target = $region96
        $region95: #{transformer_block.1} parent=91 // pred_region
          %s1740 = sand.u32 %s448, 1
          %s1741 = scalar_lea.sflag [#allocation3], %s1740
          %s1742 = sand.u32 %s448, 1
          %s1743 = smul.addr %s1742, 8
          %s1744 = scalar_lea.vmem [#allocation2], %s1743
          %1746 = dma.done %s1741, 128
        $region96: #{transformer_block.1} parent=91 // pred_fallthru
          _
      $region92: #{transformer_block.1} parent=5 // pred_fallthru
        _
    $region6: #{transformer_block.1} parent=1 // loop_footer
      %s29 = sadd.s32 1, %s25
    $region7: #{transformer_block.1} parent=1 // loop_footer_branch
      %24 = sbr.rel target = $region3
    $region8: #{transformer_block.1} parent=1 // loop_exit
      _
    %1747 = vsyncpa [#allocation3], 1
    %s1748 = scalar_lea.sflag [#allocation3], 1
    %1749 = vsyncpa %s1748, 1

</llo_original>
